<compile_context>
chip_gen: v6e
topology: v6e:2x2x1
jax: 0.10.0
libtpu: 0.0.40
codegen_flags: <defaults>
</compile_context>

<pallas_src>
import functools

import jax
import jax.numpy as jnp
from jax import lax
from jax.experimental import pallas as pl
from jax.experimental.pallas import tpu as pltpu

_LANES = 128                       # lane width of the flat dense views
_VMEM_BUDGET = 12 * 1024 * 1024    # double-buffered working-set target (fits v5e default limit)


def _apply_activation(v, name: str):
    if name == 'identity':
        return v
    if name == 'relu':
        return jnp.maximum(v, 0.0)
    if name == 'tanh':
        return jnp.tanh(v)
    if name == 'sigmoid':
        return jax.nn.sigmoid(v)
    if name == 'softplus':
        return jax.nn.softplus(v)
    raise ValueError(f"unsupported activation: {name!r}")


def _point_offset_kernel(*refs, activation: str, sigma_mode: str, emit_offset: bool):
    """off = act(offset) * (1 - sigma); points_out = points + off  (all elementwise).

    sigma_mode:
      'none'    - no sigma stream.
      'full'    - sigma ref has the same (interleaved) shape as points/offset.
      'compact' - sigma ref is the per-point (rows, 128) plane; it is expanded to the
                  channel-interleaved (rows, 384) layout with an exact one-hot matmul
                  on the otherwise-idle MXU.
    """
    it = iter(refs)
    points_ref = next(it)
    offset_ref = next(it)
    sigma_ref = next(it) if sigma_mode != 'none' else None
    points_out_ref = next(it)
    offset_out_ref = next(it) if emit_offset else None

    off = _apply_activation(offset_ref[...].astype(jnp.float32), activation)

    if sigma_mode == 'compact':
        sig = sigma_ref[...].astype(jnp.float32)             # (tr, 128) per-point sigma
        n = sig.shape[-1]                                     # 128
        w = off.shape[-1]                                     # 384 == 3 * n
        # One-hot expansion matrix E[j, m] = 1 iff j == m // 3 (built with cheap VPU ops).
        j = lax.broadcasted_iota(jnp.int32, (n, w), 0)
        m = lax.broadcasted_iota(jnp.int32, (n, w), 1)
        expand = ((m >= 3 * j) & (m < 3 * j + 3)).astype(jnp.float32)
        # (tr,128) @ (128,384) -> (tr,384); exact (one-hot selection) at HIGHEST precision,
        # and fully hidden under the HBM DMA stream on v5e/v6e/v7x.
        sig_full = jnp.dot(sig, expand,
                           precision=lax.Precision.HIGHEST,
                           preferred_element_type=jnp.float32)
        off = off * (1.0 - sig_full)
    elif sigma_mode == 'full':
        off = off * (1.0 - sigma_ref[...].astype(jnp.float32))

    points_out_ref[...] = (points_ref[...].astype(jnp.float32) + off).astype(
        points_out_ref.dtype)
    if emit_offset:
        offset_out_ref[...] = off.astype(offset_out_ref.dtype)


def point_offset_embedding_forward(
        x,
        *,
        activation='identity',
        use_sigma=True,
        in_density_field='sigma',
        in_offset_field='point_offset',
        out_offset_field='offset',
        in_points_field='points',
        out_points_field='points',
        save_points_field=None,
        block_rows=1024):
    """JAX/Pallas equivalent of PointOffsetEmbedding.forward (eval path)."""
    assert block_rows % 8 == 0, "block_rows must be a multiple of 8 (sublanes)"

    points = x[in_points_field]          # (B, P, 3)
    offset = x[in_offset_field]          # (B, P, 3)
    assert points.shape == offset.shape and points.shape[-1] == 3

    has_sigma = bool(use_sigma and (in_density_field in x))
    # Identity activation with no sigma leaves the offset unchanged -> single-output kernel,
    # the input offset array is reused as-is for the offset fields (one output stream saved).
    emit_offset = not (activation == 'identity' and not has_sigma)

    L = points.size                      # total interleaved elements (B*P*3)
    n_pts = L // 3
    _isz = lambda a: a.dtype.itemsize

    # Output dtypes pinned to the native input dtypes (never promoted by a f32 sigma).
    out_pts_dtype = points.dtype
    out_off_dtype = offset.dtype

    # ---- choose layout --------------------------------------------------------------
    if has_sigma and n_pts % _LANES == 0:
        sigma_mode, width = 'compact', 3 * _LANES        # (R, 384) streams + (R, 128) sigma
    elif L % _LANES == 0:
        sigma_mode, width = ('full' if has_sigma else 'none'), _LANES
    else:
        sigma_mode, width = ('full' if has_sigma else 'none'), None   # ragged (1, L) view

    ins, in_specs = [], []

    if width is not None:
        # Free row-major reshapes of the contiguous (B, P, 3) arrays — no copies, no transposes.
        R = L // width
        plane_shape = (R, width)
        pts_plane = jnp.reshape(points, plane_shape)
        off_plane = jnp.reshape(offset, plane_shape)

        per_row = width * (_isz(points) + _isz(offset) + _isz(points))
        if emit_offset:
            per_row += width * _isz(offset)

        sig_plane = None
        if sigma_mode == 'compact':
            sig_plane = jnp.reshape(x[in_density_field], (R, _LANES))      # per-point plane, free
            per_row += _LANES * _isz(sig_plane)
        elif sigma_mode == 'full':
            # Rare fallback (n_pts not 128-aligned but L is): broadcast in the wrapper.
            sig_plane = jnp.reshape(
                jnp.broadcast_to(
                    jnp.reshape(x[in_density_field], points.shape[:-1] + (1,)),
                    points.shape),
                plane_shape)
            per_row += width * _isz(sig_plane)

        # Tile rows: as big as the double-buffered VMEM budget allows, past the roofline knee.
        tr = min(block_rows, R)
        while tr > 8 and 2 * tr * per_row > _VMEM_BUDGET:
            tr = tr // 2
        if tr < R:
            tr = max(8, (tr // 8) * 8)

        grid = (pl.cdiv(R, tr),)
        stream_spec = pl.BlockSpec((tr, width), lambda i: (i, 0))
        sigma_spec = (pl.BlockSpec((tr, _LANES), lambda i: (i, 0))
                      if sigma_mode == 'compact' else stream_spec)
    else:
        # Unaligned total size: flat (1, L) view, lane-tiled blocks, ragged tail masked by
        # Pallas — no pad / slice round-trips in HBM.
        plane_shape = (1, L)
        pts_plane = jnp.reshape(points, plane_shape)
        off_plane = jnp.reshape(offset, plane_shape)
        sig_plane = None
        if sigma_mode == 'full':
            sig_plane = jnp.reshape(
                jnp.broadcast_to(
                    jnp.reshape(x[in_density_field], points.shape[:-1] + (1,)),
                    points.shape),
                plane_shape)
        tc = min(L, 128 * _LANES)          # modest: 1-sublane blocks are VMEM-padded 8x
        if tc < L:
            tc = (tc // _LANES) * _LANES
        grid = (pl.cdiv(L, tc),)
        stream_spec = pl.BlockSpec((1, tc), lambda i: (0, i))
        sigma_spec = stream_spec

    ins = [pts_plane, off_plane]
    in_specs = [stream_spec, stream_spec]
    if sigma_mode != 'none':
        ins.append(sig_plane)
        in_specs.append(sigma_spec)

    out_shapes = [jax.ShapeDtypeStruct(plane_shape, out_pts_dtype)]
    out_specs = [stream_spec]
    if emit_offset:
        out_shapes.append(jax.ShapeDtypeStruct(plane_shape, out_off_dtype))
        out_specs.append(stream_spec)

    # Advisory cost hint for XLA's scheduler around this HBM-bound custom call.
    flops = 3 * L
    if sigma_mode == 'compact':
        flops += 2 * _LANES * L            # one-hot expansion matmul (MXU, hidden)
    transcendentals = L if activation in ('tanh', 'sigmoid', 'softplus') else 0
    bytes_accessed = sum(int(a.size) * _isz(a) for a in ins)
    bytes_accessed += int(L) * jnp.dtype(out_pts_dtype).itemsize
    if emit_offset:
        bytes_accessed += int(L) * jnp.dtype(out_off_dtype).itemsize

    kernel = functools.partial(_point_offset_kernel,
                               activation=activation,
                               sigma_mode=sigma_mode,
                               emit_offset=emit_offset)

    results = pl.pallas_call(
        kernel,
        grid=grid,
        in_specs=in_specs,
        out_specs=tuple(out_specs) if emit_offset else out_specs[0],
        out_shape=tuple(out_shapes) if emit_offset else out_shapes[0],
        compiler_params=pltpu.CompilerParams(
            dimension_semantics=("parallel",)),   # megacore sharding on v7x, no-op elsewhere
        cost_estimate=pl.CostEstimate(flops=int(flops),
                                      transcendentals=int(transcendentals),
                                      bytes_accessed=int(bytes_accessed)),
    )(*ins)

    if emit_offset:
        pts_out_plane, off_out_plane = results
        point_offset = jnp.reshape(off_out_plane, points.shape)
    else:
        pts_out_plane = results
        point_offset = offset              # passthrough: zero extra HBM traffic

    new_points = jnp.reshape(pts_out_plane, points.shape)

    out = dict(x)
    if save_points_field is not None:
        out[save_points_field] = points
    out[in_offset_field] = point_offset
    out[out_points_field] = new_points
    if out_offset_field is not None:
        out[out_offset_field] = point_offset
    return out


def _reference(x, *, activation='identity', use_sigma=True):
    """Pure-jnp reference mirroring the torch forward."""
    points = x['points']
    off = _apply_activation(x['point_offset'].astype(jnp.float32), activation)
    if use_sigma and 'sigma' in x:
        sigma = jnp.reshape(x['sigma'], points.shape[:-1] + (1,)).astype(jnp.float32)
    else:
        sigma = jnp.zeros(points.shape[:-1] + (1,), jnp.float32)
    point_offset = off * (1.0 - sigma)
    return point_offset, points + point_offset


if __name__ == "__main__":
    key = jax.random.PRNGKey(0)
    k_pts, k_off, k_sig = jax.random.split(key, 3)

    # --- 1) sigma present, identity activation: compact-sigma path, multi-block grid ---
    B, P = 4, 512   # 2048 points -> sigma plane (16, 128), interleaved streams (16, 384)
    x = {
        'points': jax.random.normal(k_pts, (B, P, 3), jnp.float32),
        'point_offset': 0.1 * jax.random.normal(k_off, (B, P, 3), jnp.float32),
        'sigma': jax.random.uniform(k_sig, (B, P, 1), jnp.float32),
    }
    out = point_offset_embedding_forward(x, block_rows=8, save_points_field='points_raw')
    jax.block_until_ready(out['points'])
    po_ref, pts_ref = _reference(x)
    assert jnp.allclose(out['offset'], po_ref, atol=1e-5)
    assert jnp.allclose(out['point_offset'], po_ref, atol=1e-5)
    assert jnp.allclose(out['points'], pts_ref, atol=1e-5)
    assert jnp.allclose(out['points_raw'], x['points'])

    # --- 2) no sigma, tanh activation: 128-wide plane path, offset output emitted ---
    x2 = {'points': x['points'], 'point_offset': x['point_offset']}
    out2 = point_offset_embedding_forward(x2, activation='tanh')
    jax.block_until_ready(out2['points'])
    po2_ref, pts2_ref = _reference(x2, activation='tanh')
    assert jnp.allclose(out2['offset'], po2_ref, atol=1e-5)
    assert jnp.allclose(out2['points'], pts2_ref, atol=1e-5)

    # --- 3) no sigma, identity activation: single-output kernel, offset passthrough ---
    out3 = point_offset_embedding_forward(x2)
    jax.block_until_ready(out3['points'])
    _, pts3_ref = _reference(x2)
    assert out3['offset'] is x2['point_offset']        # reused input buffer, no copy
    assert out3['point_offset'] is x2['point_offset']
    assert jnp.allclose(out3['points'], pts3_ref, atol=1e-5)

    # --- 4) unaligned total size (L % 128 != 0): ragged (1, L) view, no pad/slice copies ---
    B4, P4 = 2, 37                                      # L = 222
    k4a, k4b, k4c = jax.random.split(jax.random.PRNGKey(1), 3)
    x4 = {
        'points': jax.random.normal(k4a, (B4, P4, 3), jnp.float32),
        'point_offset': 0.1 * jax.random.normal(k4b, (B4, P4, 3), jnp.float32),
        'sigma': jax.random.uniform(k4c, (B4, P4, 1), jnp.float32),
    }
    out4 = point_offset_embedding_forward(x4, activation='relu')
    jax.block_until_ready(out4['points'])
    po4_ref, pts4_ref = _reference(x4, activation='relu')
    assert jnp.allclose(out4['offset'], po4_ref, atol=1e-5)
    assert jnp.allclose(out4['points'], pts4_ref, atol=1e-5)

    print("KERNEL_OK")
</pallas_src>

<mosaic_0001>
module attributes {stable_mosaic.version = 11 : i64} {
  func.func @_point_offset_kernel(%arg0: i32, %arg1: memref<8x384xf32, #tpu.memory_space<vmem>>, %arg2: memref<8x384xf32, #tpu.memory_space<vmem>>, %arg3: memref<8x128xf32, #tpu.memory_space<vmem>>, %arg4: memref<8x384xf32, #tpu.memory_space<vmem>>, %arg5: memref<8x384xf32, #tpu.memory_space<vmem>>) attributes {dimension_semantics = [#tpu.dimension_semantics<parallel>], iteration_bounds = array<i64: 2>, scalar_prefetch = 0 : i64, scratch_operands = 0 : i64, tpu.core_type = #tpu.core_type<tc>, window_params = [{transform_indices = @transform_0, window_bounds = array<i64: 8, 384>}, {transform_indices = @transform_1, window_bounds = array<i64: 8, 384>}, {transform_indices = @transform_2, window_bounds = array<i64: 8, 128>}, {transform_indices = @transform_3, window_bounds = array<i64: 8, 384>}, {transform_indices = @transform_4, window_bounds = array<i64: 8, 384>}]} {
    %c0 = arith.constant 0 : index
    %c0_0 = arith.constant 0 : index
    %0 = vector.load %arg2[%c0, %c0_0] : memref<8x384xf32, #tpu.memory_space<vmem>>, vector<8x384xf32>
    %c0_1 = arith.constant 0 : index
    %c0_2 = arith.constant 0 : index
    %1 = vector.load %arg3[%c0_1, %c0_2] : memref<8x128xf32, #tpu.memory_space<vmem>>, vector<8x128xf32>
    %2 = tpu.iota {dimensions = array<i32: 0>} : vector<128x384xi32>
    %3 = tpu.iota {dimensions = array<i32: 1>} : vector<128x384xi32>
    %c3_i32 = arith.constant 3 : i32
    %4 = vector.broadcast %c3_i32 : i32 to vector<128x384xi32>
    %5 = arith.muli %4, %2 : vector<128x384xi32>
    %6 = arith.cmpi sge, %3, %5 : vector<128x384xi32>
    %c3_i32_3 = arith.constant 3 : i32
    %7 = vector.broadcast %c3_i32_3 : i32 to vector<128x384xi32>
    %8 = arith.muli %7, %2 : vector<128x384xi32>
    %c3_i32_4 = arith.constant 3 : i32
    %9 = vector.broadcast %c3_i32_4 : i32 to vector<128x384xi32>
    %10 = arith.addi %8, %9 : vector<128x384xi32>
    %11 = arith.cmpi slt, %3, %10 : vector<128x384xi32>
    %12 = arith.andi %6, %11 : vector<128x384xi1>
    %13 = arith.extui %12 : vector<128x384xi1> to vector<128x384xi32>
    %14 = arith.sitofp %13 : vector<128x384xi32> to vector<128x384xf32>
    %cst = arith.constant dense<0.000000e+00> : vector<8x384xf32>
    %15 = tpu.matmul %1, %14, %cst {dimension_numbers = #tpu.dot_dimension_numbers<[1], [0], [0], [1], [0, 0, 1, 1], [], []>, precision = #tpu.contract_precision<fp32>} : vector<8x128xf32>, vector<128x384xf32>, vector<8x384xf32> -> vector<8x384xf32>
    %cst_5 = arith.constant 1.000000e+00 : f32
    %16 = vector.broadcast %cst_5 : f32 to vector<8x384xf32>
    %17 = arith.subf %16, %15 : vector<8x384xf32>
    %18 = arith.mulf %0, %17 : vector<8x384xf32>
    %c0_6 = arith.constant 0 : index
    %c0_7 = arith.constant 0 : index
    %19 = vector.load %arg1[%c0_6, %c0_7] : memref<8x384xf32, #tpu.memory_space<vmem>>, vector<8x384xf32>
    %20 = arith.addf %19, %18 : vector<8x384xf32>
    %c0_8 = arith.constant 0 : index
    %c0_9 = arith.constant 0 : index
    %21 = vector.load %arg4[%c0_8, %c0_9] : memref<8x384xf32, #tpu.memory_space<vmem>>, vector<8x384xf32>
    tpu.vector_store %arg4[%c0_8, %c0_9], %20 {strides = array<i32>} : memref<8x384xf32, #tpu.memory_space<vmem>>, vector<8x384xf32>,
    %c0_10 = arith.constant 0 : index
    %c0_11 = arith.constant 0 : index
    %22 = vector.load %arg5[%c0_10, %c0_11] : memref<8x384xf32, #tpu.memory_space<vmem>>, vector<8x384xf32>
    tpu.vector_store %arg5[%c0_10, %c0_11], %18 {strides = array<i32>} : memref<8x384xf32, #tpu.memory_space<vmem>>, vector<8x384xf32>,
    return
  }
  func.func @transform_0(%arg0: i32) -> (i32, i32) {
    %c0_i32 = arith.constant 0 : i32
    %c0_i32_0 = arith.constant 0 : i32
    return %arg0, %c0_i32 : i32, i32
  }
  func.func @transform_1(%arg0: i32) -> (i32, i32) {
    %c0_i32 = arith.constant 0 : i32
    %c0_i32_0 = arith.constant 0 : i32
    return %arg0, %c0_i32 : i32, i32
  }
  func.func @transform_2(%arg0: i32) -> (i32, i32) {
    %c0_i32 = arith.constant 0 : i32
    %c0_i32_0 = arith.constant 0 : i32
    return %arg0, %c0_i32 : i32, i32
  }
  func.func @transform_3(%arg0: i32) -> (i32, i32) {
    %c0_i32 = arith.constant 0 : i32
    %c0_i32_0 = arith.constant 0 : i32
    return %arg0, %c0_i32 : i32, i32
  }
  func.func @transform_4(%arg0: i32) -> (i32, i32) {
    %c0_i32 = arith.constant 0 : i32
    %c0_i32_0 = arith.constant 0 : i32
    return %arg0, %c0_i32 : i32, i32
  }
}

</mosaic_0001>

<llo_original>
// kernel: tpu_custom_call.1
$region0: #{tpu_custom_call.1}
  #allocation0 [shape = 'u32[]', space=smem, size = 0x4, offset = 0x4, fixed_abs, tag = 'smem constant byte address 0x4 - core index']
  #allocation1 [shape = 'u32[144,128]{1,0:T(1,128)}', space=vmem, size = 0x12000, scoped, tag = 'internal scratch']
  %s0 = inlined_call_operand.hbm [shape: f32[16,384], index: 0, kind: input, shape index: {}]
  %s1 = inlined_call_operand.hbm [shape: f32[16,384], index: 1, kind: input, shape index: {}]
  %s2 = inlined_call_operand.hbm [shape: f32[16,128], index: 2, kind: input, shape index: {}]
  %s3 = inlined_call_operand.hbm [shape: f32[16,384], index: 3, kind: output, shape index: {0}]
  %s4 = inlined_call_operand.hbm [shape: f32[16,384], index: 4, kind: output, shape index: {1}]
  %5 = xla_tuple %s3, %s4
  %s6 = sld [smem:[#allocation0]]
  $region65: #{tpu_custom_call.1} parent=0
    _
  %s8 = ssub.s32 1, %s6
  %s9 = scalar_select 0, %s8, %s6
  $region1: #{tpu_custom_call.1} parent=0
    #allocation2 [shape = 'u8[24576]{0}', space=vmem, size = 0x6000, scoped, tag = 'input window, operand 0']
    #allocation3 [shape = 's32[2]{0}', space=sflag, size = 0x8, scoped, tag = 'scoped memory for tpu_custom_call.1']
    #allocation4 [shape = 's32[2]{0}', space=sflag, size = 0x8, scoped, tag = 'scoped memory for tpu_custom_call.1']
    #allocation5 [shape = 'u8[24576]{0}', space=vmem, size = 0x6000, scoped, tag = 'input window, operand 1']
    #allocation6 [shape = 's32[2]{0}', space=sflag, size = 0x8, scoped, tag = 'scoped memory for tpu_custom_call.1']
    #allocation7 [shape = 'u8[8192]{0}', space=vmem, size = 0x2000, scoped, tag = 'input window, operand 2']
    #allocation8 [shape = 'u8[24576]{0}', space=vmem, size = 0x6000, scoped, tag = 'output window, operand 0']
    #allocation9 [shape = 'u8[24576]{0}', space=vmem, size = 0x6000, scoped, tag = 'output window, operand 1']
    #allocation10 [shape = 's32[2]{0}', space=sflag, size = 0x8, scoped, tag = 'scoped memory for tpu_custom_call.1']
    %10 = vsyncpa [#allocation3], 0
    %s11 = scalar_lea.sflag [#allocation3], 1
    %12 = vsyncpa %s11, 0
    %13 = vsyncpa [#allocation6], 0
    %s14 = scalar_lea.sflag [#allocation6], 1
    %15 = vsyncpa %s14, 0
    %16 = vsyncpa [#allocation4], 0
    %s17 = scalar_lea.sflag [#allocation4], 1
    %18 = vsyncpa %s17, 0
    %19 = vsyncpa [#allocation10], 0
    %s20 = scalar_lea.sflag [#allocation10], 1
    %21 = vsyncpa %s20, 0
    loop: start=0, step=1, limit=4
    $region2: #{tpu_custom_call.1} parent=1 // loop_pre_header
      _
    $region3: #{tpu_custom_call.1} parent=1 // loop_header
      %s23 = sphi 0, %s27
      %p24 = scmp.ge.s32.totalorder %s23, 4
      %s33 = sphi 0, %s35
      %s36 = sphi 0, %s33
      %s37 = sphi 0, %s36
      %s53 = sphi 0, %s37
      %s59 = sphi 0, %s61
      %s62 = sphi 0, %s59
      %s63 = sphi 0, %s62
      %s79 = sphi 0, %s63
      %s85 = sphi 0, %s87
      %s88 = sphi 0, %s85
      %s89 = sphi 0, %s88
      %s105 = sphi 0, %s89
      %s111 = sphi 0, %s113
      %s114 = sphi 0, %s111
      %s115 = sphi 0, %s114
      %s131 = sphi 0, %s115
      %s137 = sphi 0, %s139
      %s140 = sphi 0, %s137
      %s141 = sphi 0, %s140
      %s157 = sphi 0, %s141
    $region4: #{tpu_custom_call.1} parent=1 // loop_header_branch
      %26 = sbr.rel (%p24) target = $region8
    $region5: #{tpu_custom_call.1} parent=1 // loop_body
      %s28 = ssub.s32 %s23, 1
      %s29 = ssub.s32 %s23, 2
      %s30 = sadd.s32 %s23, 1
      %s31 = ssub.s32 %s23, %s30
      %p32 = scmp.eq.s32.totalorder %s31, 0
      %s34 = sadd.s32 %s33, 1
      %s35 = scalar_select %p32, %s33, %s34
      %p38 = pneg %p32
      %p39 = scmp.eq.s32.totalorder %s23, 1
      %p40 = por %p38, %p39
      %p41 = scmp.ne.s32.totalorder %s33, %s36
      %p42 = scmp.eq.s32.totalorder %s23, 0
      %p43 = por %p41, %p42
      %p44 = scmp.ne.s32.totalorder %s33, %s36
      %p45 = scmp.eq.s32.totalorder %s28, 1
      %p46 = por %p44, %p45
      %p47 = scmp.ne.s32.totalorder %s36, %s37
      %p48 = scmp.eq.s32.totalorder %s28, 0
      %p49 = por %p47, %p48
      %p50 = scmp.ne.s32.totalorder %s36, %s37
      %p51 = scmp.eq.s32.totalorder %s29, 1
      %p52 = por %p50, %p51
      %p54 = scmp.ne.s32.totalorder %s37, %s53
      %p55 = scmp.eq.s32.totalorder %s29, 0
      %p56 = por %p54, %p55
      %s57 = ssub.s32 %s23, %s30
      %p58 = scmp.eq.s32.totalorder %s57, 0
      %s60 = sadd.s32 %s59, 1
      %s61 = scalar_select %p58, %s59, %s60
      %p64 = pneg %p58
      %p65 = scmp.eq.s32.totalorder %s23, 1
      %p66 = por %p64, %p65
      %p67 = scmp.ne.s32.totalorder %s59, %s62
      %p68 = scmp.eq.s32.totalorder %s23, 0
      %p69 = por %p67, %p68
      %p70 = scmp.ne.s32.totalorder %s59, %s62
      %p71 = scmp.eq.s32.totalorder %s28, 1
      %p72 = por %p70, %p71
      %p73 = scmp.ne.s32.totalorder %s62, %s63
      %p74 = scmp.eq.s32.totalorder %s28, 0
      %p75 = por %p73, %p74
      %p76 = scmp.ne.s32.totalorder %s62, %s63
      %p77 = scmp.eq.s32.totalorder %s29, 1
      %p78 = por %p76, %p77
      %p80 = scmp.ne.s32.totalorder %s63, %s79
      %p81 = scmp.eq.s32.totalorder %s29, 0
      %p82 = por %p80, %p81
      %s83 = ssub.s32 %s23, %s30
      %p84 = scmp.eq.s32.totalorder %s83, 0
      %s86 = sadd.s32 %s85, 1
      %s87 = scalar_select %p84, %s85, %s86
      %p90 = pneg %p84
      %p91 = scmp.eq.s32.totalorder %s23, 1
      %p92 = por %p90, %p91
      %p93 = scmp.ne.s32.totalorder %s85, %s88
      %p94 = scmp.eq.s32.totalorder %s23, 0
      %p95 = por %p93, %p94
      %p96 = scmp.ne.s32.totalorder %s85, %s88
      %p97 = scmp.eq.s32.totalorder %s28, 1
      %p98 = por %p96, %p97
      %p99 = scmp.ne.s32.totalorder %s88, %s89
      %p100 = scmp.eq.s32.totalorder %s28, 0
      %p101 = por %p99, %p100
      %p102 = scmp.ne.s32.totalorder %s88, %s89
      %p103 = scmp.eq.s32.totalorder %s29, 1
      %p104 = por %p102, %p103
      %p106 = scmp.ne.s32.totalorder %s89, %s105
      %p107 = scmp.eq.s32.totalorder %s29, 0
      %p108 = por %p106, %p107
      %s109 = ssub.s32 %s23, %s30
      %p110 = scmp.eq.s32.totalorder %s109, 0
      %s112 = sadd.s32 %s111, 1
      %s113 = scalar_select %p110, %s111, %s112
      %p116 = pneg %p110
      %p117 = scmp.eq.s32.totalorder %s23, 1
      %p118 = por %p116, %p117
      %p119 = scmp.ne.s32.totalorder %s111, %s114
      %p120 = scmp.eq.s32.totalorder %s23, 0
      %p121 = por %p119, %p120
      %p122 = scmp.ne.s32.totalorder %s111, %s114
      %p123 = scmp.eq.s32.totalorder %s28, 1
      %p124 = por %p122, %p123
      %p125 = scmp.ne.s32.totalorder %s114, %s115
      %p126 = scmp.eq.s32.totalorder %s28, 0
      %p127 = por %p125, %p126
      %p128 = scmp.ne.s32.totalorder %s114, %s115
      %p129 = scmp.eq.s32.totalorder %s29, 1
      %p130 = por %p128, %p129
      %p132 = scmp.ne.s32.totalorder %s115, %s131
      %p133 = scmp.eq.s32.totalorder %s29, 0
      %p134 = por %p132, %p133
      %s135 = ssub.s32 %s23, %s30
      %p136 = scmp.eq.s32.totalorder %s135, 0
      %s138 = sadd.s32 %s137, 1
      %s139 = scalar_select %p136, %s137, %s138
      %p142 = pneg %p136
      %p143 = scmp.eq.s32.totalorder %s23, 1
      %p144 = por %p142, %p143
      %p145 = scmp.ne.s32.totalorder %s137, %s140
      %p146 = scmp.eq.s32.totalorder %s23, 0
      %p147 = por %p145, %p146
      %p148 = scmp.ne.s32.totalorder %s137, %s140
      %p149 = scmp.eq.s32.totalorder %s28, 1
      %p150 = por %p148, %p149
      %p151 = scmp.ne.s32.totalorder %s140, %s141
      %p152 = scmp.eq.s32.totalorder %s28, 0
      %p153 = por %p151, %p152
      %p154 = scmp.ne.s32.totalorder %s140, %s141
      %p155 = scmp.eq.s32.totalorder %s29, 1
      %p156 = por %p154, %p155
      %p158 = scmp.ne.s32.totalorder %s141, %s157
      %p159 = scmp.eq.s32.totalorder %s29, 0
      %p160 = por %p158, %p159
      %p161 = scmp.le.s32.totalorder 1, %s23
      %p162 = scmp.lt.s32.totalorder %s23, 3
      %p163 = pnand %p161, %p162
      %p164 = pneg %p163
      // Predicated region
      $region9: #{tpu_custom_call.1} parent=5 // pred_check
        _
      $region10: #{tpu_custom_call.1} parent=5 // pred_check_branch
        %166 = sbr.rel (%p163) target = $region12
      $region11: #{tpu_custom_call.1} parent=5 // pred_region
        %s167 = ssub.s32 %s23, 1
      $region12: #{tpu_custom_call.1} parent=5 // pred_fallthru
        _
      %p168 = scmp.lt.s32.totalorder %s23, 2
      // Predicated region
      $region13: #{tpu_custom_call.1} parent=5 // pred_check
        %p169 = pneg %p168
      $region14: #{tpu_custom_call.1} parent=5 // pred_check_branch
        %171 = sbr.rel (%p169) target = $region16
      $region15: #{tpu_custom_call.1} parent=5 // pred_region
        // Predicated region
        $region17: #{tpu_custom_call.1} parent=15 // pred_check
          %p172 = pneg %p43
        $region18: #{tpu_custom_call.1} parent=15 // pred_check_branch
          %174 = sbr.rel (%p172) target = $region20
        $region19: #{tpu_custom_call.1} parent=15 // pred_region
          %s175 = sand.u32 %s33, 1
          %s176 = scalar_lea.sflag [#allocation3], %s175
          %s177 = sand.u32 %s33, 1
          %s178 = smul.addr %s177, 24
          %s179 = scalar_lea.vmem [#allocation2], %s178
          %s181 = ssub.s32 384, 384
          %182 = vsyncadd %s176, %s181
          %s183 = smul.addr %s23, 3
          %s184 = smul.addr %s183, 128
          %s185 = scalar_lea.hbm %s0, %s184
          %s187 = sshll.u32 %s179, 4
          %s188 = int_to_ptr.vmem [resolvable:$true] %s187
          %190 = dma.hbm_to_vmem [thread:$0]  %s185, 384, %s188, %s176
        $region20: #{tpu_custom_call.1} parent=15 // pred_fallthru
          _
        // Predicated region
        $region21: #{tpu_custom_call.1} parent=15 // pred_check
          %p191 = pneg %p69
        $region22: #{tpu_custom_call.1} parent=15 // pred_check_branch
          %193 = sbr.rel (%p191) target = $region24
        $region23: #{tpu_custom_call.1} parent=15 // pred_region
          %s194 = sand.u32 %s23, 1
          %s195 = scalar_lea.sflag [#allocation6], %s194
          %s196 = sand.u32 %s59, 1
          %s197 = smul.addr %s196, 24
          %s198 = scalar_lea.vmem [#allocation5], %s197
          %s200 = ssub.s32 384, 384
          %201 = vsyncadd %s195, %s200
          %s202 = smul.addr %s23, 3
          %s203 = smul.addr %s202, 128
          %s204 = scalar_lea.hbm %s1, %s203
          %s206 = sshll.u32 %s198, 4
          %s207 = int_to_ptr.vmem [resolvable:$true] %s206
          %209 = dma.hbm_to_vmem [thread:$0]  %s204, 384, %s207, %s195
        $region24: #{tpu_custom_call.1} parent=15 // pred_fallthru
          _
        // Predicated region
        $region25: #{tpu_custom_call.1} parent=15 // pred_check
          %p210 = pneg %p95
        $region26: #{tpu_custom_call.1} parent=15 // pred_check_branch
          %212 = sbr.rel (%p210) target = $region28
        $region27: #{tpu_custom_call.1} parent=15 // pred_region
          %s213 = sand.u32 %s23, 1
          %s214 = scalar_lea.sflag [#allocation6], %s213
          %s215 = sand.u32 %s85, 1
          %s216 = smul.addr %s215, 8
          %s217 = scalar_lea.vmem [#allocation7], %s216
          %s219 = ssub.s32 128, 128
          %220 = vsyncadd %s214, %s219
          %s221 = smul.addr %s23, 128
          %s222 = scalar_lea.hbm %s2, %s221
          %s224 = sshll.u32 %s217, 4
          %s225 = int_to_ptr.vmem [resolvable:$true] %s224
          %227 = dma.hbm_to_vmem [thread:$0]  %s222, 128, %s225, %s214
        $region28: #{tpu_custom_call.1} parent=15 // pred_fallthru
          _
      $region16: #{tpu_custom_call.1} parent=5 // pred_fallthru
        _
      %p228 = scmp.le.s32.totalorder 1, %s23
      %p229 = scmp.lt.s32.totalorder %s23, 3
      %p230 = pnand %p228, %p229
      %p231 = pneg %p230
      // Predicated region
      $region29: #{tpu_custom_call.1} parent=5 // pred_check
        _
      $region30: #{tpu_custom_call.1} parent=5 // pred_check_branch
        %233 = sbr.rel (%p230) target = $region32
      $region31: #{tpu_custom_call.1} parent=5 // pred_region
        %s234 = ssub.s32 %s23, 1
        %s235 = sand.u32 %s36, 1
        %s236 = scalar_lea.sflag [#allocation3], %s235
        %s237 = sand.u32 %s36, 1
        %s238 = smul.addr %s237, 24
        %s239 = scalar_lea.vmem [#allocation2], %s238
        // Predicated region
        $region33: #{tpu_custom_call.1} parent=31 // pred_check
          %p240 = pneg %p49
        $region34: #{tpu_custom_call.1} parent=31 // pred_check_branch
          %242 = sbr.rel (%p240) target = $region36
        $region35: #{tpu_custom_call.1} parent=31 // pred_region
          %243 = dma.done %s236, 384
        $region36: #{tpu_custom_call.1} parent=31 // pred_fallthru
          _
        %s244 = sand.u32 %s28, 1
        %s245 = scalar_lea.sflag [#allocation6], %s244
        %s246 = sand.u32 %s62, 1
        %s247 = smul.addr %s246, 24
        %s248 = scalar_lea.vmem [#allocation5], %s247
        // Predicated region
        $region37: #{tpu_custom_call.1} parent=31 // pred_check
          %p249 = pneg %p75
        $region38: #{tpu_custom_call.1} parent=31 // pred_check_branch
          %251 = sbr.rel (%p249) target = $region40
        $region39: #{tpu_custom_call.1} parent=31 // pred_region
          %252 = dma.done %s245, 384
        $region40: #{tpu_custom_call.1} parent=31 // pred_fallthru
          _
        %s253 = sand.u32 %s28, 1
        %s254 = scalar_lea.sflag [#allocation6], %s253
        %s255 = sand.u32 %s88, 1
        %s256 = smul.addr %s255, 8
        %s257 = scalar_lea.vmem [#allocation7], %s256
        // Predicated region
        $region41: #{tpu_custom_call.1} parent=31 // pred_check
          %p258 = pneg %p101
        $region42: #{tpu_custom_call.1} parent=31 // pred_check_branch
          %260 = sbr.rel (%p258) target = $region44
        $region43: #{tpu_custom_call.1} parent=31 // pred_region
          %261 = dma.done %s254, 128
        $region44: #{tpu_custom_call.1} parent=31 // pred_fallthru
          _
        %s262 = sand.u32 %s36, 1
        %s263 = scalar_lea.sflag [#allocation3], %s262
        %s264 = sand.u32 %s36, 1
        %s265 = smul.addr %s264, 24
        %s266 = scalar_lea.vmem [#allocation2], %s265
        %p267 = pneg %p49
        %p268 = pneg %p46
        %s269 = sand.u32 %s28, 1
        %s270 = scalar_lea.sflag [#allocation6], %s269
        %s271 = sand.u32 %s62, 1
        %s272 = smul.addr %s271, 24
        %s273 = scalar_lea.vmem [#allocation5], %s272
        %p274 = pneg %p75
        %p275 = pneg %p72
        %s276 = sand.u32 %s28, 1
        %s277 = scalar_lea.sflag [#allocation6], %s276
        %s278 = sand.u32 %s88, 1
        %s279 = smul.addr %s278, 8
        %s280 = scalar_lea.vmem [#allocation7], %s279
        %p281 = pneg %p101
        %p282 = pneg %p98
        %p283 = pneg %p127
        %p284 = pneg %p124
        %s285 = sand.u32 %s114, 1
        %s286 = scalar_lea.sflag [#allocation4], %s285
        %s287 = sand.u32 %s114, 1
        %s288 = smul.addr %s287, 24
        %s289 = scalar_lea.vmem [#allocation8], %s288
        %p290 = pneg %p153
        %p291 = pneg %p150
        %s292 = sand.u32 %s140, 1
        %s293 = scalar_lea.sflag [#allocation10], %s292
        %s294 = sand.u32 %s140, 1
        %s295 = smul.addr %s294, 24
        %s296 = scalar_lea.vmem [#allocation9], %s295
        %v297 = vld [vmem:[%s248] sm:$0xff]
        %v298 = vld [vmem:[%s248 + $0x8] sm:$0xff]
        %v299 = vld [vmem:[%s248 + $0x10] sm:$0xff]
        %v300 = vld [vmem:[%s257] sm:$0xff]
        %v301 = vlaneseq
        %v302 = vshrl.u32 %v301, 7
        %v303 = vadd.s32 %v302, 8
        %v304 = vadd.s32 %v302, 16
        %v305 = vadd.s32 %v302, 24
        %v306 = vadd.s32 %v302, 32
        %v307 = vadd.s32 %v302, 40
        %v308 = vadd.s32 %v302, 48
        %v309 = vadd.s32 %v302, 56
        %v310 = vadd.s32 %v302, 64
        %v311 = vadd.s32 %v302, 72
        %v312 = vadd.s32 %v302, 80
        %v313 = vadd.s32 %v302, 88
        %v314 = vadd.s32 %v302, 96
        %v315 = vadd.s32 %v302, 104
        %v316 = vadd.s32 %v302, 112
        %v317 = vadd.s32 %v302, 120
        %v318 = vlaneseq
        %v319 = vand.u32 %v318, 127
        %v320 = vadd.s32 %v319, 128
        %v321 = vadd.s32 %v319, 256
        %v322 = vmul.u32 %v302, 3
        %v323 = vmul.u32 %v303, 3
        %v324 = vmul.u32 %v304, 3
        %v325 = vmul.u32 %v305, 3
        %v326 = vmul.u32 %v306, 3
        %v327 = vmul.u32 %v307, 3
        %v328 = vmul.u32 %v308, 3
        %v329 = vmul.u32 %v309, 3
        %v330 = vmul.u32 %v310, 3
        %v331 = vmul.u32 %v311, 3
        %v332 = vmul.u32 %v312, 3
        %v333 = vmul.u32 %v313, 3
        %v334 = vmul.u32 %v314, 3
        %v335 = vmul.u32 %v315, 3
        %v336 = vmul.u32 %v316, 3
        %v337 = vmul.u32 %v317, 3
        %vm338 = vcmp.ge.s32.totalorder %v319, %v322
        %vm339 = vcmp.ge.s32.totalorder %v320, %v322
        %vm340 = vcmp.ge.s32.totalorder %v321, %v322
        %vm341 = vcmp.ge.s32.totalorder %v319, %v323
        %vm342 = vcmp.ge.s32.totalorder %v320, %v323
        %vm343 = vcmp.ge.s32.totalorder %v321, %v323
        %vm344 = vcmp.ge.s32.totalorder %v319, %v324
        %vm345 = vcmp.ge.s32.totalorder %v320, %v324
        %vm346 = vcmp.ge.s32.totalorder %v321, %v324
        %vm347 = vcmp.ge.s32.totalorder %v319, %v325
        %vm348 = vcmp.ge.s32.totalorder %v320, %v325
        %vm349 = vcmp.ge.s32.totalorder %v321, %v325
        %vm350 = vcmp.ge.s32.totalorder %v319, %v326
        %vm351 = vcmp.ge.s32.totalorder %v320, %v326
        %vm352 = vcmp.ge.s32.totalorder %v321, %v326
        %vm353 = vcmp.ge.s32.totalorder %v319, %v327
        %vm354 = vcmp.ge.s32.totalorder %v320, %v327
        %vm355 = vcmp.ge.s32.totalorder %v321, %v327
        %vm356 = vcmp.ge.s32.totalorder %v319, %v328
        %vm357 = vcmp.ge.s32.totalorder %v320, %v328
        %vm358 = vcmp.ge.s32.totalorder %v321, %v328
        %vm359 = vcmp.ge.s32.totalorder %v319, %v329
        %vm360 = vcmp.ge.s32.totalorder %v320, %v329
        %vm361 = vcmp.ge.s32.totalorder %v321, %v329
        %vm362 = vcmp.ge.s32.totalorder %v319, %v330
        %vm363 = vcmp.ge.s32.totalorder %v320, %v330
        %vm364 = vcmp.ge.s32.totalorder %v321, %v330
        %vm365 = vcmp.ge.s32.totalorder %v319, %v331
        %vm366 = vcmp.ge.s32.totalorder %v320, %v331
        %vm367 = vcmp.ge.s32.totalorder %v321, %v331
        %vm368 = vcmp.ge.s32.totalorder %v319, %v332
        %vm369 = vcmp.ge.s32.totalorder %v320, %v332
        %vm370 = vcmp.ge.s32.totalorder %v321, %v332
        %vm371 = vcmp.ge.s32.totalorder %v319, %v333
        %vm372 = vcmp.ge.s32.totalorder %v320, %v333
        %vm373 = vcmp.ge.s32.totalorder %v321, %v333
        %vm374 = vcmp.ge.s32.totalorder %v319, %v334
        %vm375 = vcmp.ge.s32.totalorder %v320, %v334
        %vm376 = vcmp.ge.s32.totalorder %v321, %v334
        %vm377 = vcmp.ge.s32.totalorder %v319, %v335
        %vm378 = vcmp.ge.s32.totalorder %v320, %v335
        %vm379 = vcmp.ge.s32.totalorder %v321, %v335
        %vm380 = vcmp.ge.s32.totalorder %v319, %v336
        %vm381 = vcmp.ge.s32.totalorder %v320, %v336
        %vm382 = vcmp.ge.s32.totalorder %v321, %v336
        %vm383 = vcmp.ge.s32.totalorder %v319, %v337
        %vm384 = vcmp.ge.s32.totalorder %v320, %v337
        %vm385 = vcmp.ge.s32.totalorder %v321, %v337
        %v386 = vadd.s32 %v322, 3
        %v387 = vadd.s32 %v323, 3
        %v388 = vadd.s32 %v324, 3
        %v389 = vadd.s32 %v325, 3
        %v390 = vadd.s32 %v326, 3
        %v391 = vadd.s32 %v327, 3
        %v392 = vadd.s32 %v328, 3
        %v393 = vadd.s32 %v329, 3
        %v394 = vadd.s32 %v330, 3
        %v395 = vadd.s32 %v331, 3
        %v396 = vadd.s32 %v332, 3
        %v397 = vadd.s32 %v333, 3
        %v398 = vadd.s32 %v334, 3
        %v399 = vadd.s32 %v335, 3
        %v400 = vadd.s32 %v336, 3
        %v401 = vadd.s32 %v337, 3
        %vm402 = vcmp.lt.s32.totalorder %v319, %v386
        %vm403 = vcmp.lt.s32.totalorder %v320, %v386
        %vm404 = vcmp.lt.s32.totalorder %v321, %v386
        %vm405 = vcmp.lt.s32.totalorder %v319, %v387
        %vm406 = vcmp.lt.s32.totalorder %v320, %v387
        %vm407 = vcmp.lt.s32.totalorder %v321, %v387
        %vm408 = vcmp.lt.s32.totalorder %v319, %v388
        %vm409 = vcmp.lt.s32.totalorder %v320, %v388
        %vm410 = vcmp.lt.s32.totalorder %v321, %v388
        %vm411 = vcmp.lt.s32.totalorder %v319, %v389
        %vm412 = vcmp.lt.s32.totalorder %v320, %v389
        %vm413 = vcmp.lt.s32.totalorder %v321, %v389
        %vm414 = vcmp.lt.s32.totalorder %v319, %v390
        %vm415 = vcmp.lt.s32.totalorder %v320, %v390
        %vm416 = vcmp.lt.s32.totalorder %v321, %v390
        %vm417 = vcmp.lt.s32.totalorder %v319, %v391
        %vm418 = vcmp.lt.s32.totalorder %v320, %v391
        %vm419 = vcmp.lt.s32.totalorder %v321, %v391
        %vm420 = vcmp.lt.s32.totalorder %v319, %v392
        %vm421 = vcmp.lt.s32.totalorder %v320, %v392
        %vm422 = vcmp.lt.s32.totalorder %v321, %v392
        %vm423 = vcmp.lt.s32.totalorder %v319, %v393
        %vm424 = vcmp.lt.s32.totalorder %v320, %v393
        %vm425 = vcmp.lt.s32.totalorder %v321, %v393
        %vm426 = vcmp.lt.s32.totalorder %v319, %v394
        %vm427 = vcmp.lt.s32.totalorder %v320, %v394
        %vm428 = vcmp.lt.s32.totalorder %v321, %v394
        %vm429 = vcmp.lt.s32.totalorder %v319, %v395
        %vm430 = vcmp.lt.s32.totalorder %v320, %v395
        %vm431 = vcmp.lt.s32.totalorder %v321, %v395
        %vm432 = vcmp.lt.s32.totalorder %v319, %v396
        %vm433 = vcmp.lt.s32.totalorder %v320, %v396
        %vm434 = vcmp.lt.s32.totalorder %v321, %v396
        %vm435 = vcmp.lt.s32.totalorder %v319, %v397
        %vm436 = vcmp.lt.s32.totalorder %v320, %v397
        %vm437 = vcmp.lt.s32.totalorder %v321, %v397
        %vm438 = vcmp.lt.s32.totalorder %v319, %v398
        %vm439 = vcmp.lt.s32.totalorder %v320, %v398
        %vm440 = vcmp.lt.s32.totalorder %v321, %v398
        %vm441 = vcmp.lt.s32.totalorder %v319, %v399
        %vm442 = vcmp.lt.s32.totalorder %v320, %v399
        %vm443 = vcmp.lt.s32.totalorder %v321, %v399
        %vm444 = vcmp.lt.s32.totalorder %v319, %v400
        %vm445 = vcmp.lt.s32.totalorder %v320, %v400
        %vm446 = vcmp.lt.s32.totalorder %v321, %v400
        %vm447 = vcmp.lt.s32.totalorder %v319, %v401
        %vm448 = vcmp.lt.s32.totalorder %v320, %v401
        %vm449 = vcmp.lt.s32.totalorder %v321, %v401
        %vm450 = vmand %vm338, %vm402
        %vm451 = vmand %vm339, %vm403
        %vm452 = vmand %vm340, %vm404
        %vm453 = vmand %vm341, %vm405
        %vm454 = vmand %vm342, %vm406
        %vm455 = vmand %vm343, %vm407
        %vm456 = vmand %vm344, %vm408
        %vm457 = vmand %vm345, %vm409
        %vm458 = vmand %vm346, %vm410
        %vm459 = vmand %vm347, %vm411
        %vm460 = vmand %vm348, %vm412
        %vm461 = vmand %vm349, %vm413
        %vm462 = vmand %vm350, %vm414
        %vm463 = vmand %vm351, %vm415
        %vm464 = vmand %vm352, %vm416
        %vm465 = vmand %vm353, %vm417
        %vm466 = vmand %vm354, %vm418
        %vm467 = vmand %vm355, %vm419
        %vm468 = vmand %vm356, %vm420
        %vm469 = vmand %vm357, %vm421
        %vm470 = vmand %vm358, %vm422
        %vm471 = vmand %vm359, %vm423
        %vm472 = vmand %vm360, %vm424
        %vm473 = vmand %vm361, %vm425
        %vm474 = vmand %vm362, %vm426
        %vm475 = vmand %vm363, %vm427
        %vm476 = vmand %vm364, %vm428
        %vm477 = vmand %vm365, %vm429
        %vm478 = vmand %vm366, %vm430
        %vm479 = vmand %vm367, %vm431
        %vm480 = vmand %vm368, %vm432
        %vm481 = vmand %vm369, %vm433
        %vm482 = vmand %vm370, %vm434
        %vm483 = vmand %vm371, %vm435
        %vm484 = vmand %vm372, %vm436
        %vm485 = vmand %vm373, %vm437
        %vm486 = vmand %vm374, %vm438
        %vm487 = vmand %vm375, %vm439
        %vm488 = vmand %vm376, %vm440
        %vm489 = vmand %vm377, %vm441
        %vm490 = vmand %vm378, %vm442
        %vm491 = vmand %vm379, %vm443
        %vm492 = vmand %vm380, %vm444
        %vm493 = vmand %vm381, %vm445
        %vm494 = vmand %vm382, %vm446
        %vm495 = vmand %vm383, %vm447
        %vm496 = vmand %vm384, %vm448
        %vm497 = vmand %vm385, %vm449
        %v498 = vsel %vm450, 1, 0
        %v499 = vsel %vm451, 1, 0
        %v500 = vsel %vm452, 1, 0
        %v501 = vsel %vm453, 1, 0
        %v502 = vsel %vm454, 1, 0
        %v503 = vsel %vm455, 1, 0
        %v504 = vsel %vm456, 1, 0
        %v505 = vsel %vm457, 1, 0
        %v506 = vsel %vm458, 1, 0
        %v507 = vsel %vm459, 1, 0
        %v508 = vsel %vm460, 1, 0
        %v509 = vsel %vm461, 1, 0
        %v510 = vsel %vm462, 1, 0
        %v511 = vsel %vm463, 1, 0
        %v512 = vsel %vm464, 1, 0
        %v513 = vsel %vm465, 1, 0
        %v514 = vsel %vm466, 1, 0
        %v515 = vsel %vm467, 1, 0
        %v516 = vsel %vm468, 1, 0
        %v517 = vsel %vm469, 1, 0
        %v518 = vsel %vm470, 1, 0
        %v519 = vsel %vm471, 1, 0
        %v520 = vsel %vm472, 1, 0
        %v521 = vsel %vm473, 1, 0
        %v522 = vsel %vm474, 1, 0
        %v523 = vsel %vm475, 1, 0
        %v524 = vsel %vm476, 1, 0
        %v525 = vsel %vm477, 1, 0
        %v526 = vsel %vm478, 1, 0
        %v527 = vsel %vm479, 1, 0
        %v528 = vsel %vm480, 1, 0
        %v529 = vsel %vm481, 1, 0
        %v530 = vsel %vm482, 1, 0
        %v531 = vsel %vm483, 1, 0
        %v532 = vsel %vm484, 1, 0
        %v533 = vsel %vm485, 1, 0
        %v534 = vsel %vm486, 1, 0
        %v535 = vsel %vm487, 1, 0
        %v536 = vsel %vm488, 1, 0
        %v537 = vsel %vm489, 1, 0
        %v538 = vsel %vm490, 1, 0
        %v539 = vsel %vm491, 1, 0
        %v540 = vsel %vm492, 1, 0
        %v541 = vsel %vm493, 1, 0
        %v542 = vsel %vm494, 1, 0
        %v543 = vsel %vm495, 1, 0
        %v544 = vsel %vm496, 1, 0
        %v545 = vsel %vm497, 1, 0
        %v546 = vcvt.s32.f32 %v498
        %v547 = vcvt.s32.f32 %v499
        %v548 = vcvt.s32.f32 %v500
        %v549 = vcvt.s32.f32 %v501
        %v550 = vcvt.s32.f32 %v502
        %v551 = vcvt.s32.f32 %v503
        %v552 = vcvt.s32.f32 %v504
        %v553 = vcvt.s32.f32 %v505
        %v554 = vcvt.s32.f32 %v506
        %v555 = vcvt.s32.f32 %v507
        %v556 = vcvt.s32.f32 %v508
        %v557 = vcvt.s32.f32 %v509
        %v558 = vcvt.s32.f32 %v510
        %v559 = vcvt.s32.f32 %v511
        %v560 = vcvt.s32.f32 %v512
        %v561 = vcvt.s32.f32 %v513
        %v562 = vcvt.s32.f32 %v514
        %v563 = vcvt.s32.f32 %v515
        %v564 = vcvt.s32.f32 %v516
        %v565 = vcvt.s32.f32 %v517
        %v566 = vcvt.s32.f32 %v518
        %v567 = vcvt.s32.f32 %v519
        %v568 = vcvt.s32.f32 %v520
        %v569 = vcvt.s32.f32 %v521
        %v570 = vcvt.s32.f32 %v522
        %v571 = vcvt.s32.f32 %v523
        %v572 = vcvt.s32.f32 %v524
        %v573 = vcvt.s32.f32 %v525
        %v574 = vcvt.s32.f32 %v526
        %v575 = vcvt.s32.f32 %v527
        %v576 = vcvt.s32.f32 %v528
        %v577 = vcvt.s32.f32 %v529
        %v578 = vcvt.s32.f32 %v530
        %v579 = vcvt.s32.f32 %v531
        %v580 = vcvt.s32.f32 %v532
        %v581 = vcvt.s32.f32 %v533
        %v582 = vcvt.s32.f32 %v534
        %v583 = vcvt.s32.f32 %v535
        %v584 = vcvt.s32.f32 %v536
        %v585 = vcvt.s32.f32 %v537
        %v586 = vcvt.s32.f32 %v538
        %v587 = vcvt.s32.f32 %v539
        %v588 = vcvt.s32.f32 %v540
        %v589 = vcvt.s32.f32 %v541
        %v590 = vcvt.s32.f32 %v542
        %v591 = vcvt.s32.f32 %v543
        %v592 = vcvt.s32.f32 %v544
        %v593 = vcvt.s32.f32 %v545
        %v594 = vand.u32 %v592, 4294901760
        %595 = vmatprep.subr.mxu0 %v594
        %v596 = vand.u32 %v591, 4294901760
        %597 = vmatpush1.msra.mxu0 %v596
        %v598 = vand.u32 %v589, 4294901760
        %599 = vmatprep.subr.mxu0 %v598
        %v600 = vand.u32 %v588, 4294901760
        %601 = vmatpush1.msra.mxu0 %v600
        %v602 = vand.u32 %v586, 4294901760
        %603 = vmatprep.subr.mxu0 %v602
        %v604 = vand.u32 %v585, 4294901760
        %605 = vmatpush1.msra.mxu0 %v604
        %v606 = vand.u32 %v583, 4294901760
        %607 = vmatprep.subr.mxu0 %v606
        %v608 = vand.u32 %v582, 4294901760
        %609 = vmatpush1.msra.mxu0 %v608
        %v610 = vand.u32 %v580, 4294901760
        %611 = vmatprep.subr.mxu0 %v610
        %v612 = vand.u32 %v579, 4294901760
        %613 = vmatpush1.msra.mxu0 %v612
        %v614 = vand.u32 %v577, 4294901760
        %615 = vmatprep.subr.mxu0 %v614
        %v616 = vand.u32 %v576, 4294901760
        %617 = vmatpush1.msra.mxu0 %v616
        %v618 = vand.u32 %v574, 4294901760
        %619 = vmatprep.subr.mxu0 %v618
        %v620 = vand.u32 %v573, 4294901760
        %621 = vmatpush1.msra.mxu0 %v620
        %v622 = vand.u32 %v571, 4294901760
        %623 = vmatprep.subr.mxu0 %v622
        %v624 = vand.u32 %v570, 4294901760
        %625 = vmatpush1.msra.mxu0 %v624
        %v626 = vand.u32 %v568, 4294901760
        %627 = vmatprep.subr.mxu0 %v626
        %v628 = vand.u32 %v567, 4294901760
        %629 = vmatpush1.msra.mxu0 %v628
        %v630 = vand.u32 %v565, 4294901760
        %631 = vmatprep.subr.mxu0 %v630
        %v632 = vand.u32 %v564, 4294901760
        %633 = vmatpush1.msra.mxu0 %v632
        %v634 = vand.u32 %v562, 4294901760
        %635 = vmatprep.subr.mxu0 %v634
        %v636 = vand.u32 %v561, 4294901760
        %637 = vmatpush1.msra.mxu0 %v636
        %v638 = vand.u32 %v559, 4294901760
        %639 = vmatprep.subr.mxu0 %v638
        %v640 = vand.u32 %v558, 4294901760
        %641 = vmatpush1.msra.mxu0 %v640
        %v642 = vand.u32 %v556, 4294901760
        %643 = vmatprep.subr.mxu0 %v642
        %v644 = vand.u32 %v555, 4294901760
        %645 = vmatpush1.msra.mxu0 %v644
        %v646 = vand.u32 %v553, 4294901760
        %647 = vmatprep.subr.mxu0 %v646
        %v648 = vand.u32 %v552, 4294901760
        %649 = vmatpush1.msra.mxu0 %v648
        %v650 = vand.u32 %v550, 4294901760
        %651 = vmatprep.subr.mxu0 %v650
        %v652 = vand.u32 %v549, 4294901760
        %653 = vmatpush1.msra.mxu0 %v652
        %v654 = vand.u32 %v547, 4294901760
        %655 = vmatprep.subr.mxu0 %v654
        %v656 = vand.u32 %v546, 4294901760
        %657 = vmatpush1.msra.mxu0 %v656
        %658 = vmatprep.subr.mxu0 0.0
        %659 = vmatpush2.msra.mxu0 0.0
        %660 = vmatprep.subr.mxu0 0.0
        %661 = vmatpush2.msra.mxu0 0.0
        %662 = vmatprep.subr.mxu0 0.0
        %663 = vmatpush2.msra.mxu0 0.0
        %664 = vmatprep.subr.mxu0 0.0
        %665 = vmatpush2.msra.mxu0 0.0
        %666 = vmatprep.subr.mxu0 0.0
        %667 = vmatpush2.msra.mxu0 0.0
        %668 = vmatprep.subr.mxu0 0.0
        %669 = vmatpush2.msra.mxu0 0.0
        %670 = vmatprep.subr.mxu0 0.0
        %671 = vmatpush2.msra.mxu0 0.0
        %672 = vmatprep.subr.mxu0 0.0
        %673 = vmatpush2.msra.mxu0 0.0
        %674 = vmatprep.subr.mxu0 0.0
        %675 = vmatpush2.msra.mxu0 0.0
        %676 = vmatprep.subr.mxu0 0.0
        %677 = vmatpush2.msra.mxu0 0.0
        %678 = vmatprep.subr.mxu0 0.0
        %679 = vmatpush2.msra.mxu0 0.0
        %680 = vmatprep.subr.mxu0 0.0
        %681 = vmatpush2.msra.mxu0 0.0
        %682 = vmatprep.subr.mxu0 0.0
        %683 = vmatpush2.msra.mxu0 0.0
        %684 = vmatprep.subr.mxu0 0.0
        %685 = vmatpush2.msra.mxu0 0.0
        %686 = vmatprep.subr.mxu0 0.0
        %687 = vmatpush2.msra.mxu0 0.0
        %688 = vmatprep.subr.mxu0 0.0
        %689 = vmatpush2.msra.mxu0 0.0
        %690 = vmatprep.mubr.f32.mxu0 0.0
        %v691 = vand.u32 %v300, 4294901760
        %v692 = vsub.f32 %v300, %v691
        %v693 = vand.u32 %v692, 4294901760
        %v694 = vsub.f32 %v692, %v693
        %v695 = vand.u32 %v694, 4294901760
        %696 = vmatmul.mubr.f32.gmra.mxu0 %v695
        %v697 = vpop.f32.mrf.mxu0
        %v698 = vadd.f32 0.0, %v697
        %v699 = vpop.f32.mrf.mxu0
        %v700 = vadd.f32 0.0, %v699
        %701 = vdwg.mxu0
        %v702 = vand.u32 %v592, 4294901760
        %v703 = vsub.f32 %v592, %v702
        %v704 = vand.u32 %v703, 4294901760
        %v705 = vsub.f32 %v703, %v704
        %v706 = vand.u32 %v705, 4294901760
        %707 = vmatprep.subr.mxu0 %v706
        %v708 = vand.u32 %v591, 4294901760
        %v709 = vsub.f32 %v591, %v708
        %v710 = vand.u32 %v709, 4294901760
        %v711 = vsub.f32 %v709, %v710
        %v712 = vand.u32 %v711, 4294901760
        %713 = vmatpush1.msra.mxu0 %v712
        %v714 = vand.u32 %v589, 4294901760
        %v715 = vsub.f32 %v589, %v714
        %v716 = vand.u32 %v715, 4294901760
        %v717 = vsub.f32 %v715, %v716
        %v718 = vand.u32 %v717, 4294901760
        %719 = vmatprep.subr.mxu0 %v718
        %v720 = vand.u32 %v588, 4294901760
        %v721 = vsub.f32 %v588, %v720
        %v722 = vand.u32 %v721, 4294901760
        %v723 = vsub.f32 %v721, %v722
        %v724 = vand.u32 %v723, 4294901760
        %725 = vmatpush1.msra.mxu0 %v724
        %v726 = vand.u32 %v586, 4294901760
        %v727 = vsub.f32 %v586, %v726
        %v728 = vand.u32 %v727, 4294901760
        %v729 = vsub.f32 %v727, %v728
        %v730 = vand.u32 %v729, 4294901760
        %731 = vmatprep.subr.mxu0 %v730
        %v732 = vand.u32 %v585, 4294901760
        %v733 = vsub.f32 %v585, %v732
        %v734 = vand.u32 %v733, 4294901760
        %v735 = vsub.f32 %v733, %v734
        %v736 = vand.u32 %v735, 4294901760
        %737 = vmatpush1.msra.mxu0 %v736
        %v738 = vand.u32 %v583, 4294901760
        %v739 = vsub.f32 %v583, %v738
        %v740 = vand.u32 %v739, 4294901760
        %v741 = vsub.f32 %v739, %v740
        %v742 = vand.u32 %v741, 4294901760
        %743 = vmatprep.subr.mxu0 %v742
        %v744 = vand.u32 %v582, 4294901760
        %v745 = vsub.f32 %v582, %v744
        %v746 = vand.u32 %v745, 4294901760
        %v747 = vsub.f32 %v745, %v746
        %v748 = vand.u32 %v747, 4294901760
        %749 = vmatpush1.msra.mxu0 %v748
        %v750 = vand.u32 %v580, 4294901760
        %v751 = vsub.f32 %v580, %v750
        %v752 = vand.u32 %v751, 4294901760
        %v753 = vsub.f32 %v751, %v752
        %v754 = vand.u32 %v753, 4294901760
        %755 = vmatprep.subr.mxu0 %v754
        %v756 = vand.u32 %v579, 4294901760
        %v757 = vsub.f32 %v579, %v756
        %v758 = vand.u32 %v757, 4294901760
        %v759 = vsub.f32 %v757, %v758
        %v760 = vand.u32 %v759, 4294901760
        %761 = vmatpush1.msra.mxu0 %v760
        %v762 = vand.u32 %v577, 4294901760
        %v763 = vsub.f32 %v577, %v762
        %v764 = vand.u32 %v763, 4294901760
        %v765 = vsub.f32 %v763, %v764
        %v766 = vand.u32 %v765, 4294901760
        %767 = vmatprep.subr.mxu0 %v766
        %v768 = vand.u32 %v576, 4294901760
        %v769 = vsub.f32 %v576, %v768
        %v770 = vand.u32 %v769, 4294901760
        %v771 = vsub.f32 %v769, %v770
        %v772 = vand.u32 %v771, 4294901760
        %773 = vmatpush1.msra.mxu0 %v772
        %v774 = vand.u32 %v574, 4294901760
        %v775 = vsub.f32 %v574, %v774
        %v776 = vand.u32 %v775, 4294901760
        %v777 = vsub.f32 %v775, %v776
        %v778 = vand.u32 %v777, 4294901760
        %779 = vmatprep.subr.mxu0 %v778
        %v780 = vand.u32 %v573, 4294901760
        %v781 = vsub.f32 %v573, %v780
        %v782 = vand.u32 %v781, 4294901760
        %v783 = vsub.f32 %v781, %v782
        %v784 = vand.u32 %v783, 4294901760
        %785 = vmatpush1.msra.mxu0 %v784
        %v786 = vand.u32 %v571, 4294901760
        %v787 = vsub.f32 %v571, %v786
        %v788 = vand.u32 %v787, 4294901760
        %v789 = vsub.f32 %v787, %v788
        %v790 = vand.u32 %v789, 4294901760
        %791 = vmatprep.subr.mxu0 %v790
        %v792 = vand.u32 %v570, 4294901760
        %v793 = vsub.f32 %v570, %v792
        %v794 = vand.u32 %v793, 4294901760
        %v795 = vsub.f32 %v793, %v794
        %v796 = vand.u32 %v795, 4294901760
        %797 = vmatpush1.msra.mxu0 %v796
        %v798 = vand.u32 %v568, 4294901760
        %v799 = vsub.f32 %v568, %v798
        %v800 = vand.u32 %v799, 4294901760
        %v801 = vsub.f32 %v799, %v800
        %v802 = vand.u32 %v801, 4294901760
        %803 = vmatprep.subr.mxu0 %v802
        %v804 = vand.u32 %v567, 4294901760
        %v805 = vsub.f32 %v567, %v804
        %v806 = vand.u32 %v805, 4294901760
        %v807 = vsub.f32 %v805, %v806
        %v808 = vand.u32 %v807, 4294901760
        %809 = vmatpush1.msra.mxu0 %v808
        %v810 = vand.u32 %v565, 4294901760
        %v811 = vsub.f32 %v565, %v810
        %v812 = vand.u32 %v811, 4294901760
        %v813 = vsub.f32 %v811, %v812
        %v814 = vand.u32 %v813, 4294901760
        %815 = vmatprep.subr.mxu0 %v814
        %v816 = vand.u32 %v564, 4294901760
        %v817 = vsub.f32 %v564, %v816
        %v818 = vand.u32 %v817, 4294901760
        %v819 = vsub.f32 %v817, %v818
        %v820 = vand.u32 %v819, 4294901760
        %821 = vmatpush1.msra.mxu0 %v820
        %v822 = vand.u32 %v562, 4294901760
        %v823 = vsub.f32 %v562, %v822
        %v824 = vand.u32 %v823, 4294901760
        %v825 = vsub.f32 %v823, %v824
        %v826 = vand.u32 %v825, 4294901760
        %827 = vmatprep.subr.mxu0 %v826
        %v828 = vand.u32 %v561, 4294901760
        %v829 = vsub.f32 %v561, %v828
        %v830 = vand.u32 %v829, 4294901760
        %v831 = vsub.f32 %v829, %v830
        %v832 = vand.u32 %v831, 4294901760
        %833 = vmatpush1.msra.mxu0 %v832
        %v834 = vand.u32 %v559, 4294901760
        %v835 = vsub.f32 %v559, %v834
        %v836 = vand.u32 %v835, 4294901760
        %v837 = vsub.f32 %v835, %v836
        %v838 = vand.u32 %v837, 4294901760
        %839 = vmatprep.subr.mxu0 %v838
        %v840 = vand.u32 %v558, 4294901760
        %v841 = vsub.f32 %v558, %v840
        %v842 = vand.u32 %v841, 4294901760
        %v843 = vsub.f32 %v841, %v842
        %v844 = vand.u32 %v843, 4294901760
        %845 = vmatpush1.msra.mxu0 %v844
        %v846 = vand.u32 %v556, 4294901760
        %v847 = vsub.f32 %v556, %v846
        %v848 = vand.u32 %v847, 4294901760
        %v849 = vsub.f32 %v847, %v848
        %v850 = vand.u32 %v849, 4294901760
        %851 = vmatprep.subr.mxu0 %v850
        %v852 = vand.u32 %v555, 4294901760
        %v853 = vsub.f32 %v555, %v852
        %v854 = vand.u32 %v853, 4294901760
        %v855 = vsub.f32 %v853, %v854
        %v856 = vand.u32 %v855, 4294901760
        %857 = vmatpush1.msra.mxu0 %v856
        %v858 = vand.u32 %v553, 4294901760
        %v859 = vsub.f32 %v553, %v858
        %v860 = vand.u32 %v859, 4294901760
        %v861 = vsub.f32 %v859, %v860
        %v862 = vand.u32 %v861, 4294901760
        %863 = vmatprep.subr.mxu0 %v862
        %v864 = vand.u32 %v552, 4294901760
        %v865 = vsub.f32 %v552, %v864
        %v866 = vand.u32 %v865, 4294901760
        %v867 = vsub.f32 %v865, %v866
        %v868 = vand.u32 %v867, 4294901760
        %869 = vmatpush1.msra.mxu0 %v868
        %v870 = vand.u32 %v550, 4294901760
        %v871 = vsub.f32 %v550, %v870
        %v872 = vand.u32 %v871, 4294901760
        %v873 = vsub.f32 %v871, %v872
        %v874 = vand.u32 %v873, 4294901760
        %875 = vmatprep.subr.mxu0 %v874
        %v876 = vand.u32 %v549, 4294901760
        %v877 = vsub.f32 %v549, %v876
        %v878 = vand.u32 %v877, 4294901760
        %v879 = vsub.f32 %v877, %v878
        %v880 = vand.u32 %v879, 4294901760
        %881 = vmatpush1.msra.mxu0 %v880
        %v882 = vand.u32 %v547, 4294901760
        %v883 = vsub.f32 %v547, %v882
        %v884 = vand.u32 %v883, 4294901760
        %v885 = vsub.f32 %v883, %v884
        %v886 = vand.u32 %v885, 4294901760
        %887 = vmatprep.subr.mxu0 %v886
        %v888 = vand.u32 %v546, 4294901760
        %v889 = vsub.f32 %v546, %v888
        %v890 = vand.u32 %v889, 4294901760
        %v891 = vsub.f32 %v889, %v890
        %v892 = vand.u32 %v891, 4294901760
        %893 = vmatpush1.msra.mxu0 %v892
        %894 = vmatprep.subr.mxu0 0.0
        %895 = vmatpush2.msra.mxu0 0.0
        %896 = vmatprep.subr.mxu0 0.0
        %897 = vmatpush2.msra.mxu0 0.0
        %898 = vmatprep.subr.mxu0 0.0
        %899 = vmatpush2.msra.mxu0 0.0
        %900 = vmatprep.subr.mxu0 0.0
        %901 = vmatpush2.msra.mxu0 0.0
        %902 = vmatprep.subr.mxu0 0.0
        %903 = vmatpush2.msra.mxu0 0.0
        %904 = vmatprep.subr.mxu0 0.0
        %905 = vmatpush2.msra.mxu0 0.0
        %906 = vmatprep.subr.mxu0 0.0
        %907 = vmatpush2.msra.mxu0 0.0
        %908 = vmatprep.subr.mxu0 0.0
        %909 = vmatpush2.msra.mxu0 0.0
        %910 = vmatprep.subr.mxu0 0.0
        %911 = vmatpush2.msra.mxu0 0.0
        %912 = vmatprep.subr.mxu0 0.0
        %913 = vmatpush2.msra.mxu0 0.0
        %914 = vmatprep.subr.mxu0 0.0
        %915 = vmatpush2.msra.mxu0 0.0
        %916 = vmatprep.subr.mxu0 0.0
        %917 = vmatpush2.msra.mxu0 0.0
        %918 = vmatprep.subr.mxu0 0.0
        %919 = vmatpush2.msra.mxu0 0.0
        %920 = vmatprep.subr.mxu0 0.0
        %921 = vmatpush2.msra.mxu0 0.0
        %922 = vmatprep.subr.mxu0 0.0
        %923 = vmatpush2.msra.mxu0 0.0
        %924 = vmatprep.subr.mxu0 0.0
        %925 = vmatpush2.msra.mxu0 0.0
        %926 = vmatprep.mubr.f32.mxu0 0.0
        %v927 = vand.u32 %v300, 4294901760
        %928 = vmatmul.mubr.f32.gmra.mxu0 %v927
        %v929 = vpop.f32.mrf.mxu0
        %v930 = vadd.f32 %v698, %v929
        %v931 = vpop.f32.mrf.mxu0
        %v932 = vadd.f32 %v700, %v931
        %933 = vdwg.mxu0
        %v934 = vand.u32 %v592, 4294901760
        %v935 = vsub.f32 %v592, %v934
        %936 = vmatprep.subr.mxu0 %v935
        %v937 = vand.u32 %v591, 4294901760
        %v938 = vsub.f32 %v591, %v937
        %939 = vmatpush1.msra.mxu0 %v938
        %v940 = vand.u32 %v589, 4294901760
        %v941 = vsub.f32 %v589, %v940
        %942 = vmatprep.subr.mxu0 %v941
        %v943 = vand.u32 %v588, 4294901760
        %v944 = vsub.f32 %v588, %v943
        %945 = vmatpush1.msra.mxu0 %v944
        %v946 = vand.u32 %v586, 4294901760
        %v947 = vsub.f32 %v586, %v946
        %948 = vmatprep.subr.mxu0 %v947
        %v949 = vand.u32 %v585, 4294901760
        %v950 = vsub.f32 %v585, %v949
        %951 = vmatpush1.msra.mxu0 %v950
        %v952 = vand.u32 %v583, 4294901760
        %v953 = vsub.f32 %v583, %v952
        %954 = vmatprep.subr.mxu0 %v953
        %v955 = vand.u32 %v582, 4294901760
        %v956 = vsub.f32 %v582, %v955
        %957 = vmatpush1.msra.mxu0 %v956
        %v958 = vand.u32 %v580, 4294901760
        %v959 = vsub.f32 %v580, %v958
        %960 = vmatprep.subr.mxu0 %v959
        %v961 = vand.u32 %v579, 4294901760
        %v962 = vsub.f32 %v579, %v961
        %963 = vmatpush1.msra.mxu0 %v962
        %v964 = vand.u32 %v577, 4294901760
        %v965 = vsub.f32 %v577, %v964
        %966 = vmatprep.subr.mxu0 %v965
        %v967 = vand.u32 %v576, 4294901760
        %v968 = vsub.f32 %v576, %v967
        %969 = vmatpush1.msra.mxu0 %v968
        %v970 = vand.u32 %v574, 4294901760
        %v971 = vsub.f32 %v574, %v970
        %972 = vmatprep.subr.mxu0 %v971
        %v973 = vand.u32 %v573, 4294901760
        %v974 = vsub.f32 %v573, %v973
        %975 = vmatpush1.msra.mxu0 %v974
        %v976 = vand.u32 %v571, 4294901760
        %v977 = vsub.f32 %v571, %v976
        %978 = vmatprep.subr.mxu0 %v977
        %v979 = vand.u32 %v570, 4294901760
        %v980 = vsub.f32 %v570, %v979
        %981 = vmatpush1.msra.mxu0 %v980
        %v982 = vand.u32 %v568, 4294901760
        %v983 = vsub.f32 %v568, %v982
        %984 = vmatprep.subr.mxu0 %v983
        %v985 = vand.u32 %v567, 4294901760
        %v986 = vsub.f32 %v567, %v985
        %987 = vmatpush1.msra.mxu0 %v986
        %v988 = vand.u32 %v565, 4294901760
        %v989 = vsub.f32 %v565, %v988
        %990 = vmatprep.subr.mxu0 %v989
        %v991 = vand.u32 %v564, 4294901760
        %v992 = vsub.f32 %v564, %v991
        %993 = vmatpush1.msra.mxu0 %v992
        %v994 = vand.u32 %v562, 4294901760
        %v995 = vsub.f32 %v562, %v994
        %996 = vmatprep.subr.mxu0 %v995
        %v997 = vand.u32 %v561, 4294901760
        %v998 = vsub.f32 %v561, %v997
        %999 = vmatpush1.msra.mxu0 %v998
        %v1000 = vand.u32 %v559, 4294901760
        %v1001 = vsub.f32 %v559, %v1000
        %1002 = vmatprep.subr.mxu0 %v1001
        %v1003 = vand.u32 %v558, 4294901760
        %v1004 = vsub.f32 %v558, %v1003
        %1005 = vmatpush1.msra.mxu0 %v1004
        %v1006 = vand.u32 %v556, 4294901760
        %v1007 = vsub.f32 %v556, %v1006
        %1008 = vmatprep.subr.mxu0 %v1007
        %v1009 = vand.u32 %v555, 4294901760
        %v1010 = vsub.f32 %v555, %v1009
        %1011 = vmatpush1.msra.mxu0 %v1010
        %v1012 = vand.u32 %v553, 4294901760
        %v1013 = vsub.f32 %v553, %v1012
        %1014 = vmatprep.subr.mxu0 %v1013
        %v1015 = vand.u32 %v552, 4294901760
        %v1016 = vsub.f32 %v552, %v1015
        %1017 = vmatpush1.msra.mxu0 %v1016
        %v1018 = vand.u32 %v550, 4294901760
        %v1019 = vsub.f32 %v550, %v1018
        %1020 = vmatprep.subr.mxu0 %v1019
        %v1021 = vand.u32 %v549, 4294901760
        %v1022 = vsub.f32 %v549, %v1021
        %1023 = vmatpush1.msra.mxu0 %v1022
        %v1024 = vand.u32 %v547, 4294901760
        %v1025 = vsub.f32 %v547, %v1024
        %1026 = vmatprep.subr.mxu0 %v1025
        %v1027 = vand.u32 %v546, 4294901760
        %v1028 = vsub.f32 %v546, %v1027
        %1029 = vmatpush1.msra.mxu0 %v1028
        %1030 = vmatprep.subr.mxu0 0.0
        %1031 = vmatpush2.msra.mxu0 0.0
        %1032 = vmatprep.subr.mxu0 0.0
        %1033 = vmatpush2.msra.mxu0 0.0
        %1034 = vmatprep.subr.mxu0 0.0
        %1035 = vmatpush2.msra.mxu0 0.0
        %1036 = vmatprep.subr.mxu0 0.0
        %1037 = vmatpush2.msra.mxu0 0.0
        %1038 = vmatprep.subr.mxu0 0.0
        %1039 = vmatpush2.msra.mxu0 0.0
        %1040 = vmatprep.subr.mxu0 0.0
        %1041 = vmatpush2.msra.mxu0 0.0
        %1042 = vmatprep.subr.mxu0 0.0
        %1043 = vmatpush2.msra.mxu0 0.0
        %1044 = vmatprep.subr.mxu0 0.0
        %1045 = vmatpush2.msra.mxu0 0.0
        %1046 = vmatprep.subr.mxu0 0.0
        %1047 = vmatpush2.msra.mxu0 0.0
        %1048 = vmatprep.subr.mxu0 0.0
        %1049 = vmatpush2.msra.mxu0 0.0
        %1050 = vmatprep.subr.mxu0 0.0
        %1051 = vmatpush2.msra.mxu0 0.0
        %1052 = vmatprep.subr.mxu0 0.0
        %1053 = vmatpush2.msra.mxu0 0.0
        %1054 = vmatprep.subr.mxu0 0.0
        %1055 = vmatpush2.msra.mxu0 0.0
        %1056 = vmatprep.subr.mxu0 0.0
        %1057 = vmatpush2.msra.mxu0 0.0
        %1058 = vmatprep.subr.mxu0 0.0
        %1059 = vmatpush2.msra.mxu0 0.0
        %1060 = vmatprep.subr.mxu0 0.0
        %1061 = vmatpush2.msra.mxu0 0.0
        %1062 = vmatprep.mubr.f32.mxu0 0.0
        %v1063 = vand.u32 %v300, 4294901760
        %v1064 = vsub.f32 %v300, %v1063
        %1065 = vmatmul.mubr.f32.gmra.mxu0 %v1064
        %v1066 = vpop.f32.mrf.mxu0
        %v1067 = vadd.f32 %v930, %v1066
        %v1068 = vpop.f32.mrf.mxu0
        %v1069 = vadd.f32 %v932, %v1068
        %1070 = vdwg.mxu0
        %v1071 = vand.u32 %v592, 4294901760
        %1072 = vmatprep.subr.mxu0 %v1071
        %v1073 = vand.u32 %v591, 4294901760
        %1074 = vmatpush1.msra.mxu0 %v1073
        %v1075 = vand.u32 %v589, 4294901760
        %1076 = vmatprep.subr.mxu0 %v1075
        %v1077 = vand.u32 %v588, 4294901760
        %1078 = vmatpush1.msra.mxu0 %v1077
        %v1079 = vand.u32 %v586, 4294901760
        %1080 = vmatprep.subr.mxu0 %v1079
        %v1081 = vand.u32 %v585, 4294901760
        %1082 = vmatpush1.msra.mxu0 %v1081
        %v1083 = vand.u32 %v583, 4294901760
        %1084 = vmatprep.subr.mxu0 %v1083
        %v1085 = vand.u32 %v582, 4294901760
        %1086 = vmatpush1.msra.mxu0 %v1085
        %v1087 = vand.u32 %v580, 4294901760
        %1088 = vmatprep.subr.mxu0 %v1087
        %v1089 = vand.u32 %v579, 4294901760
        %1090 = vmatpush1.msra.mxu0 %v1089
        %v1091 = vand.u32 %v577, 4294901760
        %1092 = vmatprep.subr.mxu0 %v1091
        %v1093 = vand.u32 %v576, 4294901760
        %1094 = vmatpush1.msra.mxu0 %v1093
        %v1095 = vand.u32 %v574, 4294901760
        %1096 = vmatprep.subr.mxu0 %v1095
        %v1097 = vand.u32 %v573, 4294901760
        %1098 = vmatpush1.msra.mxu0 %v1097
        %v1099 = vand.u32 %v571, 4294901760
        %1100 = vmatprep.subr.mxu0 %v1099
        %v1101 = vand.u32 %v570, 4294901760
        %1102 = vmatpush1.msra.mxu0 %v1101
        %v1103 = vand.u32 %v568, 4294901760
        %1104 = vmatprep.subr.mxu0 %v1103
        %v1105 = vand.u32 %v567, 4294901760
        %1106 = vmatpush1.msra.mxu0 %v1105
        %v1107 = vand.u32 %v565, 4294901760
        %1108 = vmatprep.subr.mxu0 %v1107
        %v1109 = vand.u32 %v564, 4294901760
        %1110 = vmatpush1.msra.mxu0 %v1109
        %v1111 = vand.u32 %v562, 4294901760
        %1112 = vmatprep.subr.mxu0 %v1111
        %v1113 = vand.u32 %v561, 4294901760
        %1114 = vmatpush1.msra.mxu0 %v1113
        %v1115 = vand.u32 %v559, 4294901760
        %1116 = vmatprep.subr.mxu0 %v1115
        %v1117 = vand.u32 %v558, 4294901760
        %1118 = vmatpush1.msra.mxu0 %v1117
        %v1119 = vand.u32 %v556, 4294901760
        %1120 = vmatprep.subr.mxu0 %v1119
        %v1121 = vand.u32 %v555, 4294901760
        %1122 = vmatpush1.msra.mxu0 %v1121
        %v1123 = vand.u32 %v553, 4294901760
        %1124 = vmatprep.subr.mxu0 %v1123
        %v1125 = vand.u32 %v552, 4294901760
        %1126 = vmatpush1.msra.mxu0 %v1125
        %v1127 = vand.u32 %v550, 4294901760
        %1128 = vmatprep.subr.mxu0 %v1127
        %v1129 = vand.u32 %v549, 4294901760
        %1130 = vmatpush1.msra.mxu0 %v1129
        %v1131 = vand.u32 %v547, 4294901760
        %1132 = vmatprep.subr.mxu0 %v1131
        %v1133 = vand.u32 %v546, 4294901760
        %1134 = vmatpush1.msra.mxu0 %v1133
        %1135 = vmatprep.subr.mxu0 0.0
        %1136 = vmatpush2.msra.mxu0 0.0
        %1137 = vmatprep.subr.mxu0 0.0
        %1138 = vmatpush2.msra.mxu0 0.0
        %1139 = vmatprep.subr.mxu0 0.0
        %1140 = vmatpush2.msra.mxu0 0.0
        %1141 = vmatprep.subr.mxu0 0.0
        %1142 = vmatpush2.msra.mxu0 0.0
        %1143 = vmatprep.subr.mxu0 0.0
        %1144 = vmatpush2.msra.mxu0 0.0
        %1145 = vmatprep.subr.mxu0 0.0
        %1146 = vmatpush2.msra.mxu0 0.0
        %1147 = vmatprep.subr.mxu0 0.0
        %1148 = vmatpush2.msra.mxu0 0.0
        %1149 = vmatprep.subr.mxu0 0.0
        %1150 = vmatpush2.msra.mxu0 0.0
        %1151 = vmatprep.subr.mxu0 0.0
        %1152 = vmatpush2.msra.mxu0 0.0
        %1153 = vmatprep.subr.mxu0 0.0
        %1154 = vmatpush2.msra.mxu0 0.0
        %1155 = vmatprep.subr.mxu0 0.0
        %1156 = vmatpush2.msra.mxu0 0.0
        %1157 = vmatprep.subr.mxu0 0.0
        %1158 = vmatpush2.msra.mxu0 0.0
        %1159 = vmatprep.subr.mxu0 0.0
        %1160 = vmatpush2.msra.mxu0 0.0
        %1161 = vmatprep.subr.mxu0 0.0
        %1162 = vmatpush2.msra.mxu0 0.0
        %1163 = vmatprep.subr.mxu0 0.0
        %1164 = vmatpush2.msra.mxu0 0.0
        %1165 = vmatprep.subr.mxu0 0.0
        %1166 = vmatpush2.msra.mxu0 0.0
        %1167 = vmatprep.mubr.f32.mxu0 0.0
        %v1168 = vand.u32 %v300, 4294901760
        %v1169 = vsub.f32 %v300, %v1168
        %v1170 = vand.u32 %v1169, 4294901760
        %1171 = vmatmul.mubr.f32.gmra.mxu0 %v1170
        %v1172 = vpop.f32.mrf.mxu0
        %v1173 = vadd.f32 %v1067, %v1172
        %v1174 = vpop.f32.mrf.mxu0
        %v1175 = vadd.f32 %v1069, %v1174
        %1176 = vdwg.mxu0
        %v1177 = vand.u32 %v592, 4294901760
        %v1178 = vsub.f32 %v592, %v1177
        %v1179 = vand.u32 %v1178, 4294901760
        %1180 = vmatprep.subr.mxu0 %v1179
        %v1181 = vand.u32 %v591, 4294901760
        %v1182 = vsub.f32 %v591, %v1181
        %v1183 = vand.u32 %v1182, 4294901760
        %1184 = vmatpush1.msra.mxu0 %v1183
        %v1185 = vand.u32 %v589, 4294901760
        %v1186 = vsub.f32 %v589, %v1185
        %v1187 = vand.u32 %v1186, 4294901760
        %1188 = vmatprep.subr.mxu0 %v1187
        %v1189 = vand.u32 %v588, 4294901760
        %v1190 = vsub.f32 %v588, %v1189
        %v1191 = vand.u32 %v1190, 4294901760
        %1192 = vmatpush1.msra.mxu0 %v1191
        %v1193 = vand.u32 %v586, 4294901760
        %v1194 = vsub.f32 %v586, %v1193
        %v1195 = vand.u32 %v1194, 4294901760
        %1196 = vmatprep.subr.mxu0 %v1195
        %v1197 = vand.u32 %v585, 4294901760
        %v1198 = vsub.f32 %v585, %v1197
        %v1199 = vand.u32 %v1198, 4294901760
        %1200 = vmatpush1.msra.mxu0 %v1199
        %v1201 = vand.u32 %v583, 4294901760
        %v1202 = vsub.f32 %v583, %v1201
        %v1203 = vand.u32 %v1202, 4294901760
        %1204 = vmatprep.subr.mxu0 %v1203
        %v1205 = vand.u32 %v582, 4294901760
        %v1206 = vsub.f32 %v582, %v1205
        %v1207 = vand.u32 %v1206, 4294901760
        %1208 = vmatpush1.msra.mxu0 %v1207
        %v1209 = vand.u32 %v580, 4294901760
        %v1210 = vsub.f32 %v580, %v1209
        %v1211 = vand.u32 %v1210, 4294901760
        %1212 = vmatprep.subr.mxu0 %v1211
        %v1213 = vand.u32 %v579, 4294901760
        %v1214 = vsub.f32 %v579, %v1213
        %v1215 = vand.u32 %v1214, 4294901760
        %1216 = vmatpush1.msra.mxu0 %v1215
        %v1217 = vand.u32 %v577, 4294901760
        %v1218 = vsub.f32 %v577, %v1217
        %v1219 = vand.u32 %v1218, 4294901760
        %1220 = vmatprep.subr.mxu0 %v1219
        %v1221 = vand.u32 %v576, 4294901760
        %v1222 = vsub.f32 %v576, %v1221
        %v1223 = vand.u32 %v1222, 4294901760
        %1224 = vmatpush1.msra.mxu0 %v1223
        %v1225 = vand.u32 %v574, 4294901760
        %v1226 = vsub.f32 %v574, %v1225
        %v1227 = vand.u32 %v1226, 4294901760
        %1228 = vmatprep.subr.mxu0 %v1227
        %v1229 = vand.u32 %v573, 4294901760
        %v1230 = vsub.f32 %v573, %v1229
        %v1231 = vand.u32 %v1230, 4294901760
        %1232 = vmatpush1.msra.mxu0 %v1231
        %v1233 = vand.u32 %v571, 4294901760
        %v1234 = vsub.f32 %v571, %v1233
        %v1235 = vand.u32 %v1234, 4294901760
        %1236 = vmatprep.subr.mxu0 %v1235
        %v1237 = vand.u32 %v570, 4294901760
        %v1238 = vsub.f32 %v570, %v1237
        %v1239 = vand.u32 %v1238, 4294901760
        %1240 = vmatpush1.msra.mxu0 %v1239
        %v1241 = vand.u32 %v568, 4294901760
        %v1242 = vsub.f32 %v568, %v1241
        %v1243 = vand.u32 %v1242, 4294901760
        %1244 = vmatprep.subr.mxu0 %v1243
        %v1245 = vand.u32 %v567, 4294901760
        %v1246 = vsub.f32 %v567, %v1245
        %v1247 = vand.u32 %v1246, 4294901760
        %1248 = vmatpush1.msra.mxu0 %v1247
        %v1249 = vand.u32 %v565, 4294901760
        %v1250 = vsub.f32 %v565, %v1249
        %v1251 = vand.u32 %v1250, 4294901760
        %1252 = vmatprep.subr.mxu0 %v1251
        %v1253 = vand.u32 %v564, 4294901760
        %v1254 = vsub.f32 %v564, %v1253
        %v1255 = vand.u32 %v1254, 4294901760
        %1256 = vmatpush1.msra.mxu0 %v1255
        %v1257 = vand.u32 %v562, 4294901760
        %v1258 = vsub.f32 %v562, %v1257
        %v1259 = vand.u32 %v1258, 4294901760
        %1260 = vmatprep.subr.mxu0 %v1259
        %v1261 = vand.u32 %v561, 4294901760
        %v1262 = vsub.f32 %v561, %v1261
        %v1263 = vand.u32 %v1262, 4294901760
        %1264 = vmatpush1.msra.mxu0 %v1263
        %v1265 = vand.u32 %v559, 4294901760
        %v1266 = vsub.f32 %v559, %v1265
        %v1267 = vand.u32 %v1266, 4294901760
        %1268 = vmatprep.subr.mxu0 %v1267
        %v1269 = vand.u32 %v558, 4294901760
        %v1270 = vsub.f32 %v558, %v1269
        %v1271 = vand.u32 %v1270, 4294901760
        %1272 = vmatpush1.msra.mxu0 %v1271
        %v1273 = vand.u32 %v556, 4294901760
        %v1274 = vsub.f32 %v556, %v1273
        %v1275 = vand.u32 %v1274, 4294901760
        %1276 = vmatprep.subr.mxu0 %v1275
        %v1277 = vand.u32 %v555, 4294901760
        %v1278 = vsub.f32 %v555, %v1277
        %v1279 = vand.u32 %v1278, 4294901760
        %1280 = vmatpush1.msra.mxu0 %v1279
        %v1281 = vand.u32 %v553, 4294901760
        %v1282 = vsub.f32 %v553, %v1281
        %v1283 = vand.u32 %v1282, 4294901760
        %1284 = vmatprep.subr.mxu0 %v1283
        %v1285 = vand.u32 %v552, 4294901760
        %v1286 = vsub.f32 %v552, %v1285
        %v1287 = vand.u32 %v1286, 4294901760
        %1288 = vmatpush1.msra.mxu0 %v1287
        %v1289 = vand.u32 %v550, 4294901760
        %v1290 = vsub.f32 %v550, %v1289
        %v1291 = vand.u32 %v1290, 4294901760
        %1292 = vmatprep.subr.mxu0 %v1291
        %v1293 = vand.u32 %v549, 4294901760
        %v1294 = vsub.f32 %v549, %v1293
        %v1295 = vand.u32 %v1294, 4294901760
        %1296 = vmatpush1.msra.mxu0 %v1295
        %v1297 = vand.u32 %v547, 4294901760
        %v1298 = vsub.f32 %v547, %v1297
        %v1299 = vand.u32 %v1298, 4294901760
        %1300 = vmatprep.subr.mxu0 %v1299
        %v1301 = vand.u32 %v546, 4294901760
        %v1302 = vsub.f32 %v546, %v1301
        %v1303 = vand.u32 %v1302, 4294901760
        %1304 = vmatpush1.msra.mxu0 %v1303
        %1305 = vmatprep.subr.mxu0 0.0
        %1306 = vmatpush2.msra.mxu0 0.0
        %1307 = vmatprep.subr.mxu0 0.0
        %1308 = vmatpush2.msra.mxu0 0.0
        %1309 = vmatprep.subr.mxu0 0.0
        %1310 = vmatpush2.msra.mxu0 0.0
        %1311 = vmatprep.subr.mxu0 0.0
        %1312 = vmatpush2.msra.mxu0 0.0
        %1313 = vmatprep.subr.mxu0 0.0
        %1314 = vmatpush2.msra.mxu0 0.0
        %1315 = vmatprep.subr.mxu0 0.0
        %1316 = vmatpush2.msra.mxu0 0.0
        %1317 = vmatprep.subr.mxu0 0.0
        %1318 = vmatpush2.msra.mxu0 0.0
        %1319 = vmatprep.subr.mxu0 0.0
        %1320 = vmatpush2.msra.mxu0 0.0
        %1321 = vmatprep.subr.mxu0 0.0
        %1322 = vmatpush2.msra.mxu0 0.0
        %1323 = vmatprep.subr.mxu0 0.0
        %1324 = vmatpush2.msra.mxu0 0.0
        %1325 = vmatprep.subr.mxu0 0.0
        %1326 = vmatpush2.msra.mxu0 0.0
        %1327 = vmatprep.subr.mxu0 0.0
        %1328 = vmatpush2.msra.mxu0 0.0
        %1329 = vmatprep.subr.mxu0 0.0
        %1330 = vmatpush2.msra.mxu0 0.0
        %1331 = vmatprep.subr.mxu0 0.0
        %1332 = vmatpush2.msra.mxu0 0.0
        %1333 = vmatprep.subr.mxu0 0.0
        %1334 = vmatpush2.msra.mxu0 0.0
        %1335 = vmatprep.subr.mxu0 0.0
        %1336 = vmatpush2.msra.mxu0 0.0
        %1337 = vmatprep.mubr.f32.mxu0 0.0
        %v1338 = vand.u32 %v300, 4294901760
        %1339 = vmatmul.mubr.f32.gmra.mxu0 %v1338
        %v1340 = vpop.f32.mrf.mxu0
        %v1341 = vadd.f32 %v1173, %v1340
        %v1342 = vpop.f32.mrf.mxu0
        %v1343 = vadd.f32 %v1175, %v1342
        %1344 = vdwg.mxu0
        %v1345 = vand.u32 %v592, 4294901760
        %1346 = vmatprep.subr.mxu0 %v1345
        %v1347 = vand.u32 %v591, 4294901760
        %1348 = vmatpush1.msra.mxu0 %v1347
        %v1349 = vand.u32 %v589, 4294901760
        %1350 = vmatprep.subr.mxu0 %v1349
        %v1351 = vand.u32 %v588, 4294901760
        %1352 = vmatpush1.msra.mxu0 %v1351
        %v1353 = vand.u32 %v586, 4294901760
        %1354 = vmatprep.subr.mxu0 %v1353
        %v1355 = vand.u32 %v585, 4294901760
        %1356 = vmatpush1.msra.mxu0 %v1355
        %v1357 = vand.u32 %v583, 4294901760
        %1358 = vmatprep.subr.mxu0 %v1357
        %v1359 = vand.u32 %v582, 4294901760
        %1360 = vmatpush1.msra.mxu0 %v1359
        %v1361 = vand.u32 %v580, 4294901760
        %1362 = vmatprep.subr.mxu0 %v1361
        %v1363 = vand.u32 %v579, 4294901760
        %1364 = vmatpush1.msra.mxu0 %v1363
        %v1365 = vand.u32 %v577, 4294901760
        %1366 = vmatprep.subr.mxu0 %v1365
        %v1367 = vand.u32 %v576, 4294901760
        %1368 = vmatpush1.msra.mxu0 %v1367
        %v1369 = vand.u32 %v574, 4294901760
        %1370 = vmatprep.subr.mxu0 %v1369
        %v1371 = vand.u32 %v573, 4294901760
        %1372 = vmatpush1.msra.mxu0 %v1371
        %v1373 = vand.u32 %v571, 4294901760
        %1374 = vmatprep.subr.mxu0 %v1373
        %v1375 = vand.u32 %v570, 4294901760
        %1376 = vmatpush1.msra.mxu0 %v1375
        %v1377 = vand.u32 %v568, 4294901760
        %1378 = vmatprep.subr.mxu0 %v1377
        %v1379 = vand.u32 %v567, 4294901760
        %1380 = vmatpush1.msra.mxu0 %v1379
        %v1381 = vand.u32 %v565, 4294901760
        %1382 = vmatprep.subr.mxu0 %v1381
        %v1383 = vand.u32 %v564, 4294901760
        %1384 = vmatpush1.msra.mxu0 %v1383
        %v1385 = vand.u32 %v562, 4294901760
        %1386 = vmatprep.subr.mxu0 %v1385
        %v1387 = vand.u32 %v561, 4294901760
        %1388 = vmatpush1.msra.mxu0 %v1387
        %v1389 = vand.u32 %v559, 4294901760
        %1390 = vmatprep.subr.mxu0 %v1389
        %v1391 = vand.u32 %v558, 4294901760
        %1392 = vmatpush1.msra.mxu0 %v1391
        %v1393 = vand.u32 %v556, 4294901760
        %1394 = vmatprep.subr.mxu0 %v1393
        %v1395 = vand.u32 %v555, 4294901760
        %1396 = vmatpush1.msra.mxu0 %v1395
        %v1397 = vand.u32 %v553, 4294901760
        %1398 = vmatprep.subr.mxu0 %v1397
        %v1399 = vand.u32 %v552, 4294901760
        %1400 = vmatpush1.msra.mxu0 %v1399
        %v1401 = vand.u32 %v550, 4294901760
        %1402 = vmatprep.subr.mxu0 %v1401
        %v1403 = vand.u32 %v549, 4294901760
        %1404 = vmatpush1.msra.mxu0 %v1403
        %v1405 = vand.u32 %v547, 4294901760
        %1406 = vmatprep.subr.mxu0 %v1405
        %v1407 = vand.u32 %v546, 4294901760
        %1408 = vmatpush1.msra.mxu0 %v1407
        %1409 = vmatprep.subr.mxu0 0.0
        %1410 = vmatpush2.msra.mxu0 0.0
        %1411 = vmatprep.subr.mxu0 0.0
        %1412 = vmatpush2.msra.mxu0 0.0
        %1413 = vmatprep.subr.mxu0 0.0
        %1414 = vmatpush2.msra.mxu0 0.0
        %1415 = vmatprep.subr.mxu0 0.0
        %1416 = vmatpush2.msra.mxu0 0.0
        %1417 = vmatprep.subr.mxu0 0.0
        %1418 = vmatpush2.msra.mxu0 0.0
        %1419 = vmatprep.subr.mxu0 0.0
        %1420 = vmatpush2.msra.mxu0 0.0
        %1421 = vmatprep.subr.mxu0 0.0
        %1422 = vmatpush2.msra.mxu0 0.0
        %1423 = vmatprep.subr.mxu0 0.0
        %1424 = vmatpush2.msra.mxu0 0.0
        %1425 = vmatprep.subr.mxu0 0.0
        %1426 = vmatpush2.msra.mxu0 0.0
        %1427 = vmatprep.subr.mxu0 0.0
        %1428 = vmatpush2.msra.mxu0 0.0
        %1429 = vmatprep.subr.mxu0 0.0
        %1430 = vmatpush2.msra.mxu0 0.0
        %1431 = vmatprep.subr.mxu0 0.0
        %1432 = vmatpush2.msra.mxu0 0.0
        %1433 = vmatprep.subr.mxu0 0.0
        %1434 = vmatpush2.msra.mxu0 0.0
        %1435 = vmatprep.subr.mxu0 0.0
        %1436 = vmatpush2.msra.mxu0 0.0
        %1437 = vmatprep.subr.mxu0 0.0
        %1438 = vmatpush2.msra.mxu0 0.0
        %1439 = vmatprep.subr.mxu0 0.0
        %1440 = vmatpush2.msra.mxu0 0.0
        %1441 = vmatprep.mubr.f32.mxu0 0.0
        %v1442 = vand.u32 %v300, 4294901760
        %1443 = vmatmul.mubr.f32.gmra.mxu0 %v1442
        %v1444 = vpop.f32.mrf.mxu0
        %v1445 = vadd.f32 %v1341, %v1444
        %v1446 = vpop.f32.mrf.mxu0
        %v1447 = vadd.f32 %v1343, %v1446
        %1448 = vdwg.mxu0
        %1449 = vmatprep.subr.mxu0 0.0
        %v1450 = vand.u32 %v593, 4294901760
        %1451 = vmatpush1.msra.mxu0 %v1450
        %1452 = vmatprep.subr.mxu0 0.0
        %v1453 = vand.u32 %v590, 4294901760
        %1454 = vmatpush1.msra.mxu0 %v1453
        %1455 = vmatprep.subr.mxu0 0.0
        %v1456 = vand.u32 %v587, 4294901760
        %1457 = vmatpush1.msra.mxu0 %v1456
        %1458 = vmatprep.subr.mxu0 0.0
        %v1459 = vand.u32 %v584, 4294901760
        %1460 = vmatpush1.msra.mxu0 %v1459
        %1461 = vmatprep.subr.mxu0 0.0
        %v1462 = vand.u32 %v581, 4294901760
        %1463 = vmatpush1.msra.mxu0 %v1462
        %1464 = vmatprep.subr.mxu0 0.0
        %v1465 = vand.u32 %v578, 4294901760
        %1466 = vmatpush1.msra.mxu0 %v1465
        %1467 = vmatprep.subr.mxu0 0.0
        %v1468 = vand.u32 %v575, 4294901760
        %1469 = vmatpush1.msra.mxu0 %v1468
        %1470 = vmatprep.subr.mxu0 0.0
        %v1471 = vand.u32 %v572, 4294901760
        %1472 = vmatpush1.msra.mxu0 %v1471
        %1473 = vmatprep.subr.mxu0 0.0
        %v1474 = vand.u32 %v569, 4294901760
        %1475 = vmatpush1.msra.mxu0 %v1474
        %1476 = vmatprep.subr.mxu0 0.0
        %v1477 = vand.u32 %v566, 4294901760
        %1478 = vmatpush1.msra.mxu0 %v1477
        %1479 = vmatprep.subr.mxu0 0.0
        %v1480 = vand.u32 %v563, 4294901760
        %1481 = vmatpush1.msra.mxu0 %v1480
        %1482 = vmatprep.subr.mxu0 0.0
        %v1483 = vand.u32 %v560, 4294901760
        %1484 = vmatpush1.msra.mxu0 %v1483
        %1485 = vmatprep.subr.mxu0 0.0
        %v1486 = vand.u32 %v557, 4294901760
        %1487 = vmatpush1.msra.mxu0 %v1486
        %1488 = vmatprep.subr.mxu0 0.0
        %v1489 = vand.u32 %v554, 4294901760
        %1490 = vmatpush1.msra.mxu0 %v1489
        %1491 = vmatprep.subr.mxu0 0.0
        %v1492 = vand.u32 %v551, 4294901760
        %1493 = vmatpush1.msra.mxu0 %v1492
        %1494 = vmatprep.subr.mxu0 0.0
        %v1495 = vand.u32 %v548, 4294901760
        %1496 = vmatpush1.msra.mxu0 %v1495
        %1497 = vmatprep.subr.mxu0 0.0
        %1498 = vmatpush2.msra.mxu0 0.0
        %1499 = vmatprep.subr.mxu0 0.0
        %1500 = vmatpush2.msra.mxu0 0.0
        %1501 = vmatprep.subr.mxu0 0.0
        %1502 = vmatpush2.msra.mxu0 0.0
        %1503 = vmatprep.subr.mxu0 0.0
        %1504 = vmatpush2.msra.mxu0 0.0
        %1505 = vmatprep.subr.mxu0 0.0
        %1506 = vmatpush2.msra.mxu0 0.0
        %1507 = vmatprep.subr.mxu0 0.0
        %1508 = vmatpush2.msra.mxu0 0.0
        %1509 = vmatprep.subr.mxu0 0.0
        %1510 = vmatpush2.msra.mxu0 0.0
        %1511 = vmatprep.subr.mxu0 0.0
        %1512 = vmatpush2.msra.mxu0 0.0
        %1513 = vmatprep.subr.mxu0 0.0
        %1514 = vmatpush2.msra.mxu0 0.0
        %1515 = vmatprep.subr.mxu0 0.0
        %1516 = vmatpush2.msra.mxu0 0.0
        %1517 = vmatprep.subr.mxu0 0.0
        %1518 = vmatpush2.msra.mxu0 0.0
        %1519 = vmatprep.subr.mxu0 0.0
        %1520 = vmatpush2.msra.mxu0 0.0
        %1521 = vmatprep.subr.mxu0 0.0
        %1522 = vmatpush2.msra.mxu0 0.0
        %1523 = vmatprep.subr.mxu0 0.0
        %1524 = vmatpush2.msra.mxu0 0.0
        %1525 = vmatprep.subr.mxu0 0.0
        %1526 = vmatpush2.msra.mxu0 0.0
        %1527 = vmatprep.subr.mxu0 0.0
        %1528 = vmatpush2.msra.mxu0 0.0
        %1529 = vmatprep.mubr.f32.mxu0 0.0
        %v1530 = vand.u32 %v300, 4294901760
        %v1531 = vsub.f32 %v300, %v1530
        %v1532 = vand.u32 %v1531, 4294901760
        %v1533 = vsub.f32 %v1531, %v1532
        %v1534 = vand.u32 %v1533, 4294901760
        %1535 = vmatmul.mubr.f32.gmra.mxu0 %v1534
        %v1536 = vpop.f32.mrf.mxu0
        %v1537 = vadd.f32 0.0, %v1536
        %v1538 = vpop.f32.mrf.mxu0
        %1539 = vdwg.mxu0
        %1540 = vmatprep.subr.mxu0 0.0
        %v1541 = vand.u32 %v593, 4294901760
        %v1542 = vsub.f32 %v593, %v1541
        %v1543 = vand.u32 %v1542, 4294901760
        %v1544 = vsub.f32 %v1542, %v1543
        %v1545 = vand.u32 %v1544, 4294901760
        %1546 = vmatpush1.msra.mxu0 %v1545
        %1547 = vmatprep.subr.mxu0 0.0
        %v1548 = vand.u32 %v590, 4294901760
        %v1549 = vsub.f32 %v590, %v1548
        %v1550 = vand.u32 %v1549, 4294901760
        %v1551 = vsub.f32 %v1549, %v1550
        %v1552 = vand.u32 %v1551, 4294901760
        %1553 = vmatpush1.msra.mxu0 %v1552
        %1554 = vmatprep.subr.mxu0 0.0
        %v1555 = vand.u32 %v587, 4294901760
        %v1556 = vsub.f32 %v587, %v1555
        %v1557 = vand.u32 %v1556, 4294901760
        %v1558 = vsub.f32 %v1556, %v1557
        %v1559 = vand.u32 %v1558, 4294901760
        %1560 = vmatpush1.msra.mxu0 %v1559
        %1561 = vmatprep.subr.mxu0 0.0
        %v1562 = vand.u32 %v584, 4294901760
        %v1563 = vsub.f32 %v584, %v1562
        %v1564 = vand.u32 %v1563, 4294901760
        %v1565 = vsub.f32 %v1563, %v1564
        %v1566 = vand.u32 %v1565, 4294901760
        %1567 = vmatpush1.msra.mxu0 %v1566
        %1568 = vmatprep.subr.mxu0 0.0
        %v1569 = vand.u32 %v581, 4294901760
        %v1570 = vsub.f32 %v581, %v1569
        %v1571 = vand.u32 %v1570, 4294901760
        %v1572 = vsub.f32 %v1570, %v1571
        %v1573 = vand.u32 %v1572, 4294901760
        %1574 = vmatpush1.msra.mxu0 %v1573
        %1575 = vmatprep.subr.mxu0 0.0
        %v1576 = vand.u32 %v578, 4294901760
        %v1577 = vsub.f32 %v578, %v1576
        %v1578 = vand.u32 %v1577, 4294901760
        %v1579 = vsub.f32 %v1577, %v1578
        %v1580 = vand.u32 %v1579, 4294901760
        %1581 = vmatpush1.msra.mxu0 %v1580
        %1582 = vmatprep.subr.mxu0 0.0
        %v1583 = vand.u32 %v575, 4294901760
        %v1584 = vsub.f32 %v575, %v1583
        %v1585 = vand.u32 %v1584, 4294901760
        %v1586 = vsub.f32 %v1584, %v1585
        %v1587 = vand.u32 %v1586, 4294901760
        %1588 = vmatpush1.msra.mxu0 %v1587
        %1589 = vmatprep.subr.mxu0 0.0
        %v1590 = vand.u32 %v572, 4294901760
        %v1591 = vsub.f32 %v572, %v1590
        %v1592 = vand.u32 %v1591, 4294901760
        %v1593 = vsub.f32 %v1591, %v1592
        %v1594 = vand.u32 %v1593, 4294901760
        %1595 = vmatpush1.msra.mxu0 %v1594
        %1596 = vmatprep.subr.mxu0 0.0
        %v1597 = vand.u32 %v569, 4294901760
        %v1598 = vsub.f32 %v569, %v1597
        %v1599 = vand.u32 %v1598, 4294901760
        %v1600 = vsub.f32 %v1598, %v1599
        %v1601 = vand.u32 %v1600, 4294901760
        %1602 = vmatpush1.msra.mxu0 %v1601
        %1603 = vmatprep.subr.mxu0 0.0
        %v1604 = vand.u32 %v566, 4294901760
        %v1605 = vsub.f32 %v566, %v1604
        %v1606 = vand.u32 %v1605, 4294901760
        %v1607 = vsub.f32 %v1605, %v1606
        %v1608 = vand.u32 %v1607, 4294901760
        %1609 = vmatpush1.msra.mxu0 %v1608
        %1610 = vmatprep.subr.mxu0 0.0
        %v1611 = vand.u32 %v563, 4294901760
        %v1612 = vsub.f32 %v563, %v1611
        %v1613 = vand.u32 %v1612, 4294901760
        %v1614 = vsub.f32 %v1612, %v1613
        %v1615 = vand.u32 %v1614, 4294901760
        %1616 = vmatpush1.msra.mxu0 %v1615
        %1617 = vmatprep.subr.mxu0 0.0
        %v1618 = vand.u32 %v560, 4294901760
        %v1619 = vsub.f32 %v560, %v1618
        %v1620 = vand.u32 %v1619, 4294901760
        %v1621 = vsub.f32 %v1619, %v1620
        %v1622 = vand.u32 %v1621, 4294901760
        %1623 = vmatpush1.msra.mxu0 %v1622
        %1624 = vmatprep.subr.mxu0 0.0
        %v1625 = vand.u32 %v557, 4294901760
        %v1626 = vsub.f32 %v557, %v1625
        %v1627 = vand.u32 %v1626, 4294901760
        %v1628 = vsub.f32 %v1626, %v1627
        %v1629 = vand.u32 %v1628, 4294901760
        %1630 = vmatpush1.msra.mxu0 %v1629
        %1631 = vmatprep.subr.mxu0 0.0
        %v1632 = vand.u32 %v554, 4294901760
        %v1633 = vsub.f32 %v554, %v1632
        %v1634 = vand.u32 %v1633, 4294901760
        %v1635 = vsub.f32 %v1633, %v1634
        %v1636 = vand.u32 %v1635, 4294901760
        %1637 = vmatpush1.msra.mxu0 %v1636
        %1638 = vmatprep.subr.mxu0 0.0
        %v1639 = vand.u32 %v551, 4294901760
        %v1640 = vsub.f32 %v551, %v1639
        %v1641 = vand.u32 %v1640, 4294901760
        %v1642 = vsub.f32 %v1640, %v1641
        %v1643 = vand.u32 %v1642, 4294901760
        %1644 = vmatpush1.msra.mxu0 %v1643
        %1645 = vmatprep.subr.mxu0 0.0
        %v1646 = vand.u32 %v548, 4294901760
        %v1647 = vsub.f32 %v548, %v1646
        %v1648 = vand.u32 %v1647, 4294901760
        %v1649 = vsub.f32 %v1647, %v1648
        %v1650 = vand.u32 %v1649, 4294901760
        %1651 = vmatpush1.msra.mxu0 %v1650
        %1652 = vmatprep.subr.mxu0 0.0
        %1653 = vmatpush2.msra.mxu0 0.0
        %1654 = vmatprep.subr.mxu0 0.0
        %1655 = vmatpush2.msra.mxu0 0.0
        %1656 = vmatprep.subr.mxu0 0.0
        %1657 = vmatpush2.msra.mxu0 0.0
        %1658 = vmatprep.subr.mxu0 0.0
        %1659 = vmatpush2.msra.mxu0 0.0
        %1660 = vmatprep.subr.mxu0 0.0
        %1661 = vmatpush2.msra.mxu0 0.0
        %1662 = vmatprep.subr.mxu0 0.0
        %1663 = vmatpush2.msra.mxu0 0.0
        %1664 = vmatprep.subr.mxu0 0.0
        %1665 = vmatpush2.msra.mxu0 0.0
        %1666 = vmatprep.subr.mxu0 0.0
        %1667 = vmatpush2.msra.mxu0 0.0
        %1668 = vmatprep.subr.mxu0 0.0
        %1669 = vmatpush2.msra.mxu0 0.0
        %1670 = vmatprep.subr.mxu0 0.0
        %1671 = vmatpush2.msra.mxu0 0.0
        %1672 = vmatprep.subr.mxu0 0.0
        %1673 = vmatpush2.msra.mxu0 0.0
        %1674 = vmatprep.subr.mxu0 0.0
        %1675 = vmatpush2.msra.mxu0 0.0
        %1676 = vmatprep.subr.mxu0 0.0
        %1677 = vmatpush2.msra.mxu0 0.0
        %1678 = vmatprep.subr.mxu0 0.0
        %1679 = vmatpush2.msra.mxu0 0.0
        %1680 = vmatprep.subr.mxu0 0.0
        %1681 = vmatpush2.msra.mxu0 0.0
        %1682 = vmatprep.subr.mxu0 0.0
        %1683 = vmatpush2.msra.mxu0 0.0
        %1684 = vmatprep.mubr.f32.mxu0 0.0
        %v1685 = vand.u32 %v300, 4294901760
        %1686 = vmatmul.mubr.f32.gmra.mxu0 %v1685
        %v1687 = vpop.f32.mrf.mxu0
        %v1688 = vadd.f32 %v1537, %v1687
        %v1689 = vpop.f32.mrf.mxu0
        %1690 = vdwg.mxu0
        %1691 = vmatprep.subr.mxu0 0.0
        %v1692 = vand.u32 %v593, 4294901760
        %v1693 = vsub.f32 %v593, %v1692
        %1694 = vmatpush1.msra.mxu0 %v1693
        %1695 = vmatprep.subr.mxu0 0.0
        %v1696 = vand.u32 %v590, 4294901760
        %v1697 = vsub.f32 %v590, %v1696
        %1698 = vmatpush1.msra.mxu0 %v1697
        %1699 = vmatprep.subr.mxu0 0.0
        %v1700 = vand.u32 %v587, 4294901760
        %v1701 = vsub.f32 %v587, %v1700
        %1702 = vmatpush1.msra.mxu0 %v1701
        %1703 = vmatprep.subr.mxu0 0.0
        %v1704 = vand.u32 %v584, 4294901760
        %v1705 = vsub.f32 %v584, %v1704
        %1706 = vmatpush1.msra.mxu0 %v1705
        %1707 = vmatprep.subr.mxu0 0.0
        %v1708 = vand.u32 %v581, 4294901760
        %v1709 = vsub.f32 %v581, %v1708
        %1710 = vmatpush1.msra.mxu0 %v1709
        %1711 = vmatprep.subr.mxu0 0.0
        %v1712 = vand.u32 %v578, 4294901760
        %v1713 = vsub.f32 %v578, %v1712
        %1714 = vmatpush1.msra.mxu0 %v1713
        %1715 = vmatprep.subr.mxu0 0.0
        %v1716 = vand.u32 %v575, 4294901760
        %v1717 = vsub.f32 %v575, %v1716
        %1718 = vmatpush1.msra.mxu0 %v1717
        %1719 = vmatprep.subr.mxu0 0.0
        %v1720 = vand.u32 %v572, 4294901760
        %v1721 = vsub.f32 %v572, %v1720
        %1722 = vmatpush1.msra.mxu0 %v1721
        %1723 = vmatprep.subr.mxu0 0.0
        %v1724 = vand.u32 %v569, 4294901760
        %v1725 = vsub.f32 %v569, %v1724
        %1726 = vmatpush1.msra.mxu0 %v1725
        %1727 = vmatprep.subr.mxu0 0.0
        %v1728 = vand.u32 %v566, 4294901760
        %v1729 = vsub.f32 %v566, %v1728
        %1730 = vmatpush1.msra.mxu0 %v1729
        %1731 = vmatprep.subr.mxu0 0.0
        %v1732 = vand.u32 %v563, 4294901760
        %v1733 = vsub.f32 %v563, %v1732
        %1734 = vmatpush1.msra.mxu0 %v1733
        %1735 = vmatprep.subr.mxu0 0.0
        %v1736 = vand.u32 %v560, 4294901760
        %v1737 = vsub.f32 %v560, %v1736
        %1738 = vmatpush1.msra.mxu0 %v1737
        %1739 = vmatprep.subr.mxu0 0.0
        %v1740 = vand.u32 %v557, 4294901760
        %v1741 = vsub.f32 %v557, %v1740
        %1742 = vmatpush1.msra.mxu0 %v1741
        %1743 = vmatprep.subr.mxu0 0.0
        %v1744 = vand.u32 %v554, 4294901760
        %v1745 = vsub.f32 %v554, %v1744
        %1746 = vmatpush1.msra.mxu0 %v1745
        %1747 = vmatprep.subr.mxu0 0.0
        %v1748 = vand.u32 %v551, 4294901760
        %v1749 = vsub.f32 %v551, %v1748
        %1750 = vmatpush1.msra.mxu0 %v1749
        %1751 = vmatprep.subr.mxu0 0.0
        %v1752 = vand.u32 %v548, 4294901760
        %v1753 = vsub.f32 %v548, %v1752
        %1754 = vmatpush1.msra.mxu0 %v1753
        %1755 = vmatprep.subr.mxu0 0.0
        %1756 = vmatpush2.msra.mxu0 0.0
        %1757 = vmatprep.subr.mxu0 0.0
        %1758 = vmatpush2.msra.mxu0 0.0
        %1759 = vmatprep.subr.mxu0 0.0
        %1760 = vmatpush2.msra.mxu0 0.0
        %1761 = vmatprep.subr.mxu0 0.0
        %1762 = vmatpush2.msra.mxu0 0.0
        %1763 = vmatprep.subr.mxu0 0.0
        %1764 = vmatpush2.msra.mxu0 0.0
        %1765 = vmatprep.subr.mxu0 0.0
        %1766 = vmatpush2.msra.mxu0 0.0
        %1767 = vmatprep.subr.mxu0 0.0
        %1768 = vmatpush2.msra.mxu0 0.0
        %1769 = vmatprep.subr.mxu0 0.0
        %1770 = vmatpush2.msra.mxu0 0.0
        %1771 = vmatprep.subr.mxu0 0.0
        %1772 = vmatpush2.msra.mxu0 0.0
        %1773 = vmatprep.subr.mxu0 0.0
        %1774 = vmatpush2.msra.mxu0 0.0
        %1775 = vmatprep.subr.mxu0 0.0
        %1776 = vmatpush2.msra.mxu0 0.0
        %1777 = vmatprep.subr.mxu0 0.0
        %1778 = vmatpush2.msra.mxu0 0.0
        %1779 = vmatprep.subr.mxu0 0.0
        %1780 = vmatpush2.msra.mxu0 0.0
        %1781 = vmatprep.subr.mxu0 0.0
        %1782 = vmatpush2.msra.mxu0 0.0
        %1783 = vmatprep.subr.mxu0 0.0
        %1784 = vmatpush2.msra.mxu0 0.0
        %1785 = vmatprep.subr.mxu0 0.0
        %1786 = vmatpush2.msra.mxu0 0.0
        %1787 = vmatprep.mubr.f32.mxu0 0.0
        %v1788 = vand.u32 %v300, 4294901760
        %v1789 = vsub.f32 %v300, %v1788
        %1790 = vmatmul.mubr.f32.gmra.mxu0 %v1789
        %v1791 = vpop.f32.mrf.mxu0
        %v1792 = vadd.f32 %v1688, %v1791
        %v1793 = vpop.f32.mrf.mxu0
        %1794 = vdwg.mxu0
        %1795 = vmatprep.subr.mxu0 0.0
        %v1796 = vand.u32 %v593, 4294901760
        %1797 = vmatpush1.msra.mxu0 %v1796
        %1798 = vmatprep.subr.mxu0 0.0
        %v1799 = vand.u32 %v590, 4294901760
        %1800 = vmatpush1.msra.mxu0 %v1799
        %1801 = vmatprep.subr.mxu0 0.0
        %v1802 = vand.u32 %v587, 4294901760
        %1803 = vmatpush1.msra.mxu0 %v1802
        %1804 = vmatprep.subr.mxu0 0.0
        %v1805 = vand.u32 %v584, 4294901760
        %1806 = vmatpush1.msra.mxu0 %v1805
        %1807 = vmatprep.subr.mxu0 0.0
        %v1808 = vand.u32 %v581, 4294901760
        %1809 = vmatpush1.msra.mxu0 %v1808
        %1810 = vmatprep.subr.mxu0 0.0
        %v1811 = vand.u32 %v578, 4294901760
        %1812 = vmatpush1.msra.mxu0 %v1811
        %1813 = vmatprep.subr.mxu0 0.0
        %v1814 = vand.u32 %v575, 4294901760
        %1815 = vmatpush1.msra.mxu0 %v1814
        %1816 = vmatprep.subr.mxu0 0.0
        %v1817 = vand.u32 %v572, 4294901760
        %1818 = vmatpush1.msra.mxu0 %v1817
        %1819 = vmatprep.subr.mxu0 0.0
        %v1820 = vand.u32 %v569, 4294901760
        %1821 = vmatpush1.msra.mxu0 %v1820
        %1822 = vmatprep.subr.mxu0 0.0
        %v1823 = vand.u32 %v566, 4294901760
        %1824 = vmatpush1.msra.mxu0 %v1823
        %1825 = vmatprep.subr.mxu0 0.0
        %v1826 = vand.u32 %v563, 4294901760
        %1827 = vmatpush1.msra.mxu0 %v1826
        %1828 = vmatprep.subr.mxu0 0.0
        %v1829 = vand.u32 %v560, 4294901760
        %1830 = vmatpush1.msra.mxu0 %v1829
        %1831 = vmatprep.subr.mxu0 0.0
        %v1832 = vand.u32 %v557, 4294901760
        %1833 = vmatpush1.msra.mxu0 %v1832
        %1834 = vmatprep.subr.mxu0 0.0
        %v1835 = vand.u32 %v554, 4294901760
        %1836 = vmatpush1.msra.mxu0 %v1835
        %1837 = vmatprep.subr.mxu0 0.0
        %v1838 = vand.u32 %v551, 4294901760
        %1839 = vmatpush1.msra.mxu0 %v1838
        %1840 = vmatprep.subr.mxu0 0.0
        %v1841 = vand.u32 %v548, 4294901760
        %1842 = vmatpush1.msra.mxu0 %v1841
        %1843 = vmatprep.subr.mxu0 0.0
        %1844 = vmatpush2.msra.mxu0 0.0
        %1845 = vmatprep.subr.mxu0 0.0
        %1846 = vmatpush2.msra.mxu0 0.0
        %1847 = vmatprep.subr.mxu0 0.0
        %1848 = vmatpush2.msra.mxu0 0.0
        %1849 = vmatprep.subr.mxu0 0.0
        %1850 = vmatpush2.msra.mxu0 0.0
        %1851 = vmatprep.subr.mxu0 0.0
        %1852 = vmatpush2.msra.mxu0 0.0
        %1853 = vmatprep.subr.mxu0 0.0
        %1854 = vmatpush2.msra.mxu0 0.0
        %1855 = vmatprep.subr.mxu0 0.0
        %1856 = vmatpush2.msra.mxu0 0.0
        %1857 = vmatprep.subr.mxu0 0.0
        %1858 = vmatpush2.msra.mxu0 0.0
        %1859 = vmatprep.subr.mxu0 0.0
        %1860 = vmatpush2.msra.mxu0 0.0
        %1861 = vmatprep.subr.mxu0 0.0
        %1862 = vmatpush2.msra.mxu0 0.0
        %1863 = vmatprep.subr.mxu0 0.0
        %1864 = vmatpush2.msra.mxu0 0.0
        %1865 = vmatprep.subr.mxu0 0.0
        %1866 = vmatpush2.msra.mxu0 0.0
        %1867 = vmatprep.subr.mxu0 0.0
        %1868 = vmatpush2.msra.mxu0 0.0
        %1869 = vmatprep.subr.mxu0 0.0
        %1870 = vmatpush2.msra.mxu0 0.0
        %1871 = vmatprep.subr.mxu0 0.0
        %1872 = vmatpush2.msra.mxu0 0.0
        %1873 = vmatprep.subr.mxu0 0.0
        %1874 = vmatpush2.msra.mxu0 0.0
        %1875 = vmatprep.mubr.f32.mxu0 0.0
        %v1876 = vand.u32 %v300, 4294901760
        %v1877 = vsub.f32 %v300, %v1876
        %v1878 = vand.u32 %v1877, 4294901760
        %1879 = vmatmul.mubr.f32.gmra.mxu0 %v1878
        %v1880 = vpop.f32.mrf.mxu0
        %v1881 = vadd.f32 %v1792, %v1880
        %v1882 = vpop.f32.mrf.mxu0
        %1883 = vdwg.mxu0
        %1884 = vmatprep.subr.mxu0 0.0
        %v1885 = vand.u32 %v593, 4294901760
        %v1886 = vsub.f32 %v593, %v1885
        %v1887 = vand.u32 %v1886, 4294901760
        %1888 = vmatpush1.msra.mxu0 %v1887
        %1889 = vmatprep.subr.mxu0 0.0
        %v1890 = vand.u32 %v590, 4294901760
        %v1891 = vsub.f32 %v590, %v1890
        %v1892 = vand.u32 %v1891, 4294901760
        %1893 = vmatpush1.msra.mxu0 %v1892
        %1894 = vmatprep.subr.mxu0 0.0
        %v1895 = vand.u32 %v587, 4294901760
        %v1896 = vsub.f32 %v587, %v1895
        %v1897 = vand.u32 %v1896, 4294901760
        %1898 = vmatpush1.msra.mxu0 %v1897
        %1899 = vmatprep.subr.mxu0 0.0
        %v1900 = vand.u32 %v584, 4294901760
        %v1901 = vsub.f32 %v584, %v1900
        %v1902 = vand.u32 %v1901, 4294901760
        %1903 = vmatpush1.msra.mxu0 %v1902
        %1904 = vmatprep.subr.mxu0 0.0
        %v1905 = vand.u32 %v581, 4294901760
        %v1906 = vsub.f32 %v581, %v1905
        %v1907 = vand.u32 %v1906, 4294901760
        %1908 = vmatpush1.msra.mxu0 %v1907
        %1909 = vmatprep.subr.mxu0 0.0
        %v1910 = vand.u32 %v578, 4294901760
        %v1911 = vsub.f32 %v578, %v1910
        %v1912 = vand.u32 %v1911, 4294901760
        %1913 = vmatpush1.msra.mxu0 %v1912
        %1914 = vmatprep.subr.mxu0 0.0
        %v1915 = vand.u32 %v575, 4294901760
        %v1916 = vsub.f32 %v575, %v1915
        %v1917 = vand.u32 %v1916, 4294901760
        %1918 = vmatpush1.msra.mxu0 %v1917
        %1919 = vmatprep.subr.mxu0 0.0
        %v1920 = vand.u32 %v572, 4294901760
        %v1921 = vsub.f32 %v572, %v1920
        %v1922 = vand.u32 %v1921, 4294901760
        %1923 = vmatpush1.msra.mxu0 %v1922
        %1924 = vmatprep.subr.mxu0 0.0
        %v1925 = vand.u32 %v569, 4294901760
        %v1926 = vsub.f32 %v569, %v1925
        %v1927 = vand.u32 %v1926, 4294901760
        %1928 = vmatpush1.msra.mxu0 %v1927
        %1929 = vmatprep.subr.mxu0 0.0
        %v1930 = vand.u32 %v566, 4294901760
        %v1931 = vsub.f32 %v566, %v1930
        %v1932 = vand.u32 %v1931, 4294901760
        %1933 = vmatpush1.msra.mxu0 %v1932
        %1934 = vmatprep.subr.mxu0 0.0
        %v1935 = vand.u32 %v563, 4294901760
        %v1936 = vsub.f32 %v563, %v1935
        %v1937 = vand.u32 %v1936, 4294901760
        %1938 = vmatpush1.msra.mxu0 %v1937
        %1939 = vmatprep.subr.mxu0 0.0
        %v1940 = vand.u32 %v560, 4294901760
        %v1941 = vsub.f32 %v560, %v1940
        %v1942 = vand.u32 %v1941, 4294901760
        %1943 = vmatpush1.msra.mxu0 %v1942
        %1944 = vmatprep.subr.mxu0 0.0
        %v1945 = vand.u32 %v557, 4294901760
        %v1946 = vsub.f32 %v557, %v1945
        %v1947 = vand.u32 %v1946, 4294901760
        %1948 = vmatpush1.msra.mxu0 %v1947
        %1949 = vmatprep.subr.mxu0 0.0
        %v1950 = vand.u32 %v554, 4294901760
        %v1951 = vsub.f32 %v554, %v1950
        %v1952 = vand.u32 %v1951, 4294901760
        %1953 = vmatpush1.msra.mxu0 %v1952
        %1954 = vmatprep.subr.mxu0 0.0
        %v1955 = vand.u32 %v551, 4294901760
        %v1956 = vsub.f32 %v551, %v1955
        %v1957 = vand.u32 %v1956, 4294901760
        %1958 = vmatpush1.msra.mxu0 %v1957
        %1959 = vmatprep.subr.mxu0 0.0
        %v1960 = vand.u32 %v548, 4294901760
        %v1961 = vsub.f32 %v548, %v1960
        %v1962 = vand.u32 %v1961, 4294901760
        %1963 = vmatpush1.msra.mxu0 %v1962
        %1964 = vmatprep.subr.mxu0 0.0
        %1965 = vmatpush2.msra.mxu0 0.0
        %1966 = vmatprep.subr.mxu0 0.0
        %1967 = vmatpush2.msra.mxu0 0.0
        %1968 = vmatprep.subr.mxu0 0.0
        %1969 = vmatpush2.msra.mxu0 0.0
        %1970 = vmatprep.subr.mxu0 0.0
        %1971 = vmatpush2.msra.mxu0 0.0
        %1972 = vmatprep.subr.mxu0 0.0
        %1973 = vmatpush2.msra.mxu0 0.0
        %1974 = vmatprep.subr.mxu0 0.0
        %1975 = vmatpush2.msra.mxu0 0.0
        %1976 = vmatprep.subr.mxu0 0.0
        %1977 = vmatpush2.msra.mxu0 0.0
        %1978 = vmatprep.subr.mxu0 0.0
        %1979 = vmatpush2.msra.mxu0 0.0
        %1980 = vmatprep.subr.mxu0 0.0
        %1981 = vmatpush2.msra.mxu0 0.0
        %1982 = vmatprep.subr.mxu0 0.0
        %1983 = vmatpush2.msra.mxu0 0.0
        %1984 = vmatprep.subr.mxu0 0.0
        %1985 = vmatpush2.msra.mxu0 0.0
        %1986 = vmatprep.subr.mxu0 0.0
        %1987 = vmatpush2.msra.mxu0 0.0
        %1988 = vmatprep.subr.mxu0 0.0
        %1989 = vmatpush2.msra.mxu0 0.0
        %1990 = vmatprep.subr.mxu0 0.0
        %1991 = vmatpush2.msra.mxu0 0.0
        %1992 = vmatprep.subr.mxu0 0.0
        %1993 = vmatpush2.msra.mxu0 0.0
        %1994 = vmatprep.subr.mxu0 0.0
        %1995 = vmatpush2.msra.mxu0 0.0
        %1996 = vmatprep.mubr.f32.mxu0 0.0
        %v1997 = vand.u32 %v300, 4294901760
        %1998 = vmatmul.mubr.f32.gmra.mxu0 %v1997
        %v1999 = vpop.f32.mrf.mxu0
        %v2000 = vadd.f32 %v1881, %v1999
        %v2001 = vpop.f32.mrf.mxu0
        %2002 = vdwg.mxu0
        %2003 = vmatprep.subr.mxu0 0.0
        %v2004 = vand.u32 %v593, 4294901760
        %2005 = vmatpush1.msra.mxu0 %v2004
        %2006 = vmatprep.subr.mxu0 0.0
        %v2007 = vand.u32 %v590, 4294901760
        %2008 = vmatpush1.msra.mxu0 %v2007
        %2009 = vmatprep.subr.mxu0 0.0
        %v2010 = vand.u32 %v587, 4294901760
        %2011 = vmatpush1.msra.mxu0 %v2010
        %2012 = vmatprep.subr.mxu0 0.0
        %v2013 = vand.u32 %v584, 4294901760
        %2014 = vmatpush1.msra.mxu0 %v2013
        %2015 = vmatprep.subr.mxu0 0.0
        %v2016 = vand.u32 %v581, 4294901760
        %2017 = vmatpush1.msra.mxu0 %v2016
        %2018 = vmatprep.subr.mxu0 0.0
        %v2019 = vand.u32 %v578, 4294901760
        %2020 = vmatpush1.msra.mxu0 %v2019
        %2021 = vmatprep.subr.mxu0 0.0
        %v2022 = vand.u32 %v575, 4294901760
        %2023 = vmatpush1.msra.mxu0 %v2022
        %2024 = vmatprep.subr.mxu0 0.0
        %v2025 = vand.u32 %v572, 4294901760
        %2026 = vmatpush1.msra.mxu0 %v2025
        %2027 = vmatprep.subr.mxu0 0.0
        %v2028 = vand.u32 %v569, 4294901760
        %2029 = vmatpush1.msra.mxu0 %v2028
        %2030 = vmatprep.subr.mxu0 0.0
        %v2031 = vand.u32 %v566, 4294901760
        %2032 = vmatpush1.msra.mxu0 %v2031
        %2033 = vmatprep.subr.mxu0 0.0
        %v2034 = vand.u32 %v563, 4294901760
        %2035 = vmatpush1.msra.mxu0 %v2034
        %2036 = vmatprep.subr.mxu0 0.0
        %v2037 = vand.u32 %v560, 4294901760
        %2038 = vmatpush1.msra.mxu0 %v2037
        %2039 = vmatprep.subr.mxu0 0.0
        %v2040 = vand.u32 %v557, 4294901760
        %2041 = vmatpush1.msra.mxu0 %v2040
        %2042 = vmatprep.subr.mxu0 0.0
        %v2043 = vand.u32 %v554, 4294901760
        %2044 = vmatpush1.msra.mxu0 %v2043
        %2045 = vmatprep.subr.mxu0 0.0
        %v2046 = vand.u32 %v551, 4294901760
        %2047 = vmatpush1.msra.mxu0 %v2046
        %2048 = vmatprep.subr.mxu0 0.0
        %v2049 = vand.u32 %v548, 4294901760
        %2050 = vmatpush1.msra.mxu0 %v2049
        %2051 = vmatprep.subr.mxu0 0.0
        %2052 = vmatpush2.msra.mxu0 0.0
        %2053 = vmatprep.subr.mxu0 0.0
        %2054 = vmatpush2.msra.mxu0 0.0
        %2055 = vmatprep.subr.mxu0 0.0
        %2056 = vmatpush2.msra.mxu0 0.0
        %2057 = vmatprep.subr.mxu0 0.0
        %2058 = vmatpush2.msra.mxu0 0.0
        %2059 = vmatprep.subr.mxu0 0.0
        %2060 = vmatpush2.msra.mxu0 0.0
        %2061 = vmatprep.subr.mxu0 0.0
        %2062 = vmatpush2.msra.mxu0 0.0
        %2063 = vmatprep.subr.mxu0 0.0
        %2064 = vmatpush2.msra.mxu0 0.0
        %2065 = vmatprep.subr.mxu0 0.0
        %2066 = vmatpush2.msra.mxu0 0.0
        %2067 = vmatprep.subr.mxu0 0.0
        %2068 = vmatpush2.msra.mxu0 0.0
        %2069 = vmatprep.subr.mxu0 0.0
        %2070 = vmatpush2.msra.mxu0 0.0
        %2071 = vmatprep.subr.mxu0 0.0
        %2072 = vmatpush2.msra.mxu0 0.0
        %2073 = vmatprep.subr.mxu0 0.0
        %2074 = vmatpush2.msra.mxu0 0.0
        %2075 = vmatprep.subr.mxu0 0.0
        %2076 = vmatpush2.msra.mxu0 0.0
        %2077 = vmatprep.subr.mxu0 0.0
        %2078 = vmatpush2.msra.mxu0 0.0
        %2079 = vmatprep.subr.mxu0 0.0
        %2080 = vmatpush2.msra.mxu0 0.0
        %2081 = vmatprep.subr.mxu0 0.0
        %2082 = vmatpush2.msra.mxu0 0.0
        %2083 = vmatprep.mubr.f32.mxu0 0.0
        %v2084 = vand.u32 %v300, 4294901760
        %2085 = vmatmul.mubr.f32.gmra.mxu0 %v2084
        %v2086 = vpop.f32.mrf.mxu0
        %v2087 = vadd.f32 %v2000, %v2086
        %v2088 = vpop.f32.mrf.mxu0
        %2089 = vdwg.mxu0
        %v2090 = vsub.f32 1.0, %v1445
        %v2091 = vsub.f32 1.0, %v1447
        %v2092 = vsub.f32 1.0, %v2087
        %v2093 = vmul.f32 %v297, %v2090
        %v2094 = vmul.f32 %v298, %v2091
        %v2095 = vmul.f32 %v299, %v2092
        %v2096 = vld [vmem:[%s239] sm:$0xff]
        %v2097 = vld [vmem:[%s239 + $0x8] sm:$0xff]
        %v2098 = vld [vmem:[%s239 + $0x10] sm:$0xff]
        %v2099 = vadd.f32 %v2096, %v2093
        %v2100 = vadd.f32 %v2097, %v2094
        %v2101 = vadd.f32 %v2098, %v2095
        %2102 = vst [vmem:[%s289] sm:$0xff] %v2099
        %2103 = vst [vmem:[%s289 + $0x8] sm:$0xff] %v2100
        %2104 = vst [vmem:[%s289 + $0x10] sm:$0xff] %v2101
        %2105 = vst [vmem:[%s296] sm:$0xff] %v2093
        %2106 = vst [vmem:[%s296 + $0x8] sm:$0xff] %v2094
        %2107 = vst [vmem:[%s296 + $0x10] sm:$0xff] %v2095
        %s2108 = sand.u32 %s114, 1
        %s2109 = scalar_lea.sflag [#allocation4], %s2108
        %s2110 = sand.u32 %s114, 1
        %s2111 = smul.addr %s2110, 24
        %s2112 = scalar_lea.vmem [#allocation8], %s2111
        %s2113 = sand.u32 %s140, 1
        %s2114 = scalar_lea.sflag [#allocation10], %s2113
        %s2115 = sand.u32 %s140, 1
        %s2116 = smul.addr %s2115, 24
        %s2117 = scalar_lea.vmem [#allocation9], %s2116
        // Predicated region
        $region45: #{tpu_custom_call.1} parent=31 // pred_check
          %p2118 = pneg %p124
        $region46: #{tpu_custom_call.1} parent=31 // pred_check_branch
          %2120 = sbr.rel (%p2118) target = $region48
        $region47: #{tpu_custom_call.1} parent=31 // pred_region
          %s2122 = ssub.s32 384, 384
          %2123 = vsyncadd %s2109, %s2122
          %s2124 = smul.addr %s28, 3
          %s2125 = smul.addr %s2124, 128
          %s2126 = scalar_lea.hbm %s3, %s2125
          %s2128 = sshll.u32 %s2112, 4
          %s2129 = int_to_ptr.vmem [resolvable:$true] %s2128
          %2131 = dma.vmem_to_hbm [thread:$0]  %s2129, 384, %s2126, %s2109
        $region48: #{tpu_custom_call.1} parent=31 // pred_fallthru
          _
        // Predicated region
        $region49: #{tpu_custom_call.1} parent=31 // pred_check
          %p2132 = pneg %p150
        $region50: #{tpu_custom_call.1} parent=31 // pred_check_branch
          %2134 = sbr.rel (%p2132) target = $region52
        $region51: #{tpu_custom_call.1} parent=31 // pred_region
          %s2136 = ssub.s32 384, 384
          %2137 = vsyncadd %s2114, %s2136
          %s2138 = smul.addr %s28, 3
          %s2139 = smul.addr %s2138, 128
          %s2140 = scalar_lea.hbm %s4, %s2139
          %s2142 = sshll.u32 %s2117, 4
          %s2143 = int_to_ptr.vmem [resolvable:$true] %s2142
          %2145 = dma.vmem_to_hbm [thread:$0]  %s2143, 384, %s2140, %s2114
        $region52: #{tpu_custom_call.1} parent=31 // pred_fallthru
          _
      $region32: #{tpu_custom_call.1} parent=5 // pred_fallthru
        _
      %p2146 = scmp.le.s32.totalorder 2, %s23
      // Predicated region
      $region53: #{tpu_custom_call.1} parent=5 // pred_check
        %p2147 = pneg %p2146
      $region54: #{tpu_custom_call.1} parent=5 // pred_check_branch
        %2149 = sbr.rel (%p2147) target = $region56
      $region55: #{tpu_custom_call.1} parent=5 // pred_region
        %s2150 = ssub.s32 %s23, 2
        // Predicated region
        $region57: #{tpu_custom_call.1} parent=55 // pred_check
          %p2151 = pneg %p130
        $region58: #{tpu_custom_call.1} parent=55 // pred_check_branch
          %2153 = sbr.rel (%p2151) target = $region60
        $region59: #{tpu_custom_call.1} parent=55 // pred_region
          %s2154 = sand.u32 %s115, 1
          %s2155 = scalar_lea.sflag [#allocation4], %s2154
          %s2156 = sand.u32 %s115, 1
          %s2157 = smul.addr %s2156, 24
          %s2158 = scalar_lea.vmem [#allocation8], %s2157
          %2159 = dma.done %s2155, 384
        $region60: #{tpu_custom_call.1} parent=55 // pred_fallthru
          _
        // Predicated region
        $region61: #{tpu_custom_call.1} parent=55 // pred_check
          %p2160 = pneg %p156
        $region62: #{tpu_custom_call.1} parent=55 // pred_check_branch
          %2162 = sbr.rel (%p2160) target = $region64
        $region63: #{tpu_custom_call.1} parent=55 // pred_region
          %s2163 = sand.u32 %s141, 1
          %s2164 = scalar_lea.sflag [#allocation10], %s2163
          %s2165 = sand.u32 %s141, 1
          %s2166 = smul.addr %s2165, 24
          %s2167 = scalar_lea.vmem [#allocation9], %s2166
          %2168 = dma.done %s2164, 384
        $region64: #{tpu_custom_call.1} parent=55 // pred_fallthru
          _
      $region56: #{tpu_custom_call.1} parent=5 // pred_fallthru
        _
    $region6: #{tpu_custom_call.1} parent=1 // loop_footer
      %s27 = sadd.s32 1, %s23
    $region7: #{tpu_custom_call.1} parent=1 // loop_footer_branch
      %22 = sbr.rel target = $region3
    $region8: #{tpu_custom_call.1} parent=1 // loop_exit
      _
    %2169 = vsyncpa [#allocation3], 1
    %s2170 = scalar_lea.sflag [#allocation3], 1
    %2171 = vsyncpa %s2170, 1
    %2172 = vsyncpa [#allocation6], 1
    %s2173 = scalar_lea.sflag [#allocation6], 1
    %2174 = vsyncpa %s2173, 1
    %2175 = vsyncpa [#allocation4], 1
    %s2176 = scalar_lea.sflag [#allocation4], 1
    %2177 = vsyncpa %s2176, 1
    %2178 = vsyncpa [#allocation10], 1
    %s2179 = scalar_lea.sflag [#allocation10], 1
    %2180 = vsyncpa %s2179, 1

</llo_original>
